<compile_context>
chip_gen: v7x
topology: tpu7x:2x2x1
jax: 0.10.0
libtpu: 0.0.40
codegen_flags: <defaults>
</compile_context>

<pallas_src>
import functools
import math

import jax
import jax.numpy as jnp
from jax.experimental import pallas as pl
from jax.experimental.pallas import tpu as pltpu


def _cross_attn_kernel(
    s1_ref, q_ref, k_ref, v_ref, mask_ref,
    wo_ref, bo_ref, gamma_ref, beta_ref,
    out_ref,
    *, num_heads, matmul_dtype, approx_recip,
):
    s1 = s1_ref[0]                       # (TQ, H)  f32 residual stream
    q = q_ref[0]                         # (NH, TQ, d) matmul_dtype (scale+bias folded)
    k = k_ref[0]                         # (NH, S2, d) matmul_dtype
    v = v_ref[0]                         # (NH, S2, d) matmul_dtype
    mask = mask_ref[0]                   # (1, S2)  f32 additive mask

    # Batched-head scores: one MXU dot_general -> (NH, TQ, S2).
    scores = jax.lax.dot_general(
        q, k, (((2,), (2,)), ((0,), (0,))),
        preferred_element_type=jnp.float32)
    scores = scores + mask[None, :, :]   # single broadcast add (not per head)

    m = jnp.max(scores, axis=-1, keepdims=True)
    e = jnp.exp(scores - m)
    denom = jnp.sum(e, axis=-1, keepdims=True)
    if approx_recip:
        probs = e * pl.reciprocal(denom, approx=True)   # EUP; bf16 path only
    else:
        probs = e / denom                               # exact on f32 path
    # TODO(synk): attention-probs dropout omitted (eval-mode identity).

    ctx = jax.lax.dot_general(
        probs.astype(matmul_dtype), v, (((2,), (1,)), ((0,), (0,))),
        preferred_element_type=jnp.float32)             # (NH, TQ, d)

    # Output projection: per-head (TQ, d) @ (d, H) accumulated into a
    # lane-dense (TQ, H) f32 value.  No sub-128-lane slices, no ctx scratch
    # round-trip, no (NH, TQ, d) -> (TQ, H) relayout.
    ctx_mm = ctx.astype(matmul_dtype)
    hidden = jnp.dot(ctx_mm[0], wo_ref[0], preferred_element_type=jnp.float32)
    for h in range(1, num_heads):
        hidden = hidden + jnp.dot(ctx_mm[h], wo_ref[h],
                                  preferred_element_type=jnp.float32)
    hidden = hidden + bo_ref[...] + s1
    # TODO(synk): hidden-state dropout omitted (eval-mode identity).

    # BertSelfOutput LayerNorm (two-pass variance; eps matches torch 1e-12).
    mean = jnp.mean(hidden, axis=-1, keepdims=True)
    centered = hidden - mean
    var = jnp.mean(centered * centered, axis=-1, keepdims=True)
    inv_std = jax.lax.rsqrt(var + 1e-12)
    out = centered * inv_std * gamma_ref[...] + beta_ref[...]

    out_ref[0] = out.astype(out_ref.dtype)


def _pick_tq(s1, max_tq=256):
    """Largest MXU-friendly divisor of s1 <= max_tq (prefer multiples of 128)."""
    if s1 <= max_tq:
        return s1
    for pref in (128, 8):
        best = 0
        for tq in range(pref, max_tq + 1, pref):
            if s1 % tq == 0:
                best = tq
        if best:
            return best
    return s1


def _vmem_limit_bytes(tq, s2, h, nh, d, w_bytes):
    f32 = 4
    est = 0
    est += 2 * tq * h * f32                    # s1 tile (double-buffered)
    est += 2 * nh * tq * d * w_bytes           # q tile
    est += 2 * 2 * nh * s2 * d * w_bytes       # k + v
    est += 2 * s2 * f32                        # mask
    est += 2 * h * h * w_bytes                 # Wo (double-buffered)
    est += 2 * 4 * h * f32                     # bias / gamma / beta rows
    est += 2 * tq * h * f32                    # out tile
    # live temporaries: scores + exp (f32), probs (mm dtype), ctx, hidden
    est += nh * tq * s2 * (2 * f32 + w_bytes) + nh * tq * d * f32 + 2 * tq * h * f32
    est = int(est * 1.5)
    # 48 MiB cap is safe on v7x (64 MiB physical per TC) and plenty on v5e/v6e.
    return max(32 * 1024 * 1024, min(est, 48 * 1024 * 1024))


def bert_cross_attention(s1, s2, mask, params, *, num_heads,
                         matmul_dtype=jnp.bfloat16, tq=None):
    """mask: (B, S2) additive attention mask (BERT (B,1,1,S2) semantics)."""
    B, S1, H = s1.shape
    _, S2, _ = s2.shape
    assert H % num_heads == 0, "hidden size must be a multiple of num_heads"
    d = H // num_heads

    if tq is None:
        tq = _pick_tq(S1)
    assert S1 % tq == 0
    n_q = S1 // tq

    f32 = jnp.float32
    scale = 1.0 / math.sqrt(d)
    high_precision = jnp.dtype(matmul_dtype) == jnp.dtype(jnp.float32)

    # Q/K/V projections as plain XLA matmuls (computed once, not per q-tile).
    def project(x, w, b):
        y = jnp.einsum("bsh,oh->bso",
                       x.astype(matmul_dtype), w.astype(matmul_dtype),
                       preferred_element_type=f32)
        return y + b.astype(f32)

    def to_heads(x, s):
        return (x.reshape(B, s, num_heads, d)
                 .transpose(0, 2, 1, 3)
                 .astype(matmul_dtype))                 # (B, NH, s, d)

    q = to_heads(project(s1, params["wq"], params["bq"]) * scale, S1)
    k = to_heads(project(s2, params["wk"], params["bk"]), S2)
    v = to_heads(project(s2, params["wv"], params["bv"]), S2)

    # nn.Linear stores W as (out, in); pre-transpose + split per head so the
    # kernel computes sum_h ctx[h] @ wo_r[h].
    wo_r = params["wo"].T.reshape(num_heads, d, H).astype(matmul_dtype)
    row = lambda x: x.reshape(1, H).astype(f32)
    mask3 = mask.reshape(B, 1, S2).astype(f32)

    kernel = functools.partial(
        _cross_attn_kernel, num_heads=num_heads, matmul_dtype=matmul_dtype,
        approx_recip=not high_precision)

    return pl.pallas_call(
        kernel,
        out_shape=jax.ShapeDtypeStruct((B, S1, H), s1.dtype),
        grid_spec=pltpu.PrefetchScalarGridSpec(
            num_scalar_prefetch=0,
            grid=(B, n_q),
            in_specs=[
                pl.BlockSpec((1, tq, H), lambda b, qi: (b, qi, 0)),        # s1 tile
                pl.BlockSpec((1, num_heads, tq, d),
                             lambda b, qi: (b, 0, qi, 0)),                 # q tile
                pl.BlockSpec((1, num_heads, S2, d),
                             lambda b, qi: (b, 0, 0, 0)),                  # k
                pl.BlockSpec((1, num_heads, S2, d),
                             lambda b, qi: (b, 0, 0, 0)),                  # v
                pl.BlockSpec((1, 1, S2), lambda b, qi: (b, 0, 0)),         # mask
                pl.BlockSpec((num_heads, d, H), lambda b, qi: (0, 0, 0)),  # Wo
                pl.BlockSpec((1, H), lambda b, qi: (0, 0)),                # bo
                pl.BlockSpec((1, H), lambda b, qi: (0, 0)),                # gamma
                pl.BlockSpec((1, H), lambda b, qi: (0, 0)),                # beta
            ],
            out_specs=pl.BlockSpec((1, tq, H), lambda b, qi: (b, qi, 0)),
        ),
        compiler_params=pltpu.CompilerParams(
            dimension_semantics=("parallel", "parallel"),
            vmem_limit_bytes=_vmem_limit_bytes(
                tq, S2, H, num_heads, d, jnp.dtype(matmul_dtype).itemsize),
        ),
    )(
        s1, q, k, v, mask3,
        wo_r, row(params["bo"]), row(params["gamma"]), row(params["beta"]),
    )


def _reference(s1, s2, mask, params, *, num_heads):
    """Pure-JAX reference mirroring the PyTorch module (eval mode)."""
    B, S1, H = s1.shape
    S2 = s2.shape[1]
    d = H // num_heads

    def lin(x, w, b):
        return jnp.einsum("bsh,oh->bso", x, w) + b

    q = lin(s1, params["wq"], params["bq"]).reshape(B, S1, num_heads, d).transpose(0, 2, 1, 3)
    k = lin(s2, params["wk"], params["bk"]).reshape(B, S2, num_heads, d).transpose(0, 2, 1, 3)
    v = lin(s2, params["wv"], params["bv"]).reshape(B, S2, num_heads, d).transpose(0, 2, 1, 3)

    scores = jnp.einsum("bhqd,bhkd->bhqk", q, k) / math.sqrt(d)
    scores = scores + mask[:, None, None, :]
    probs = jax.nn.softmax(scores, axis=-1)
    ctx = jnp.einsum("bhqk,bhkd->bhqd", probs, v).transpose(0, 2, 1, 3).reshape(B, S1, H)

    hidden = lin(ctx, params["wo"], params["bo"]) + s1
    mean = jnp.mean(hidden, axis=-1, keepdims=True)
    var = jnp.mean((hidden - mean) ** 2, axis=-1, keepdims=True)
    return (hidden - mean) / jnp.sqrt(var + 1e-12) * params["gamma"] + params["beta"]


def _make_inputs(key, B, S1, S2, H):
    keys = jax.random.split(key, 12)
    s1 = jax.random.normal(keys[0], (B, S1, H), dtype=jnp.float32)
    s2 = jax.random.normal(keys[1], (B, S2, H), dtype=jnp.float32)
    keep = (jax.random.uniform(keys[2], (B, S2)) > 0.25).astype(jnp.float32)
    mask = (1.0 - keep) * -10000.0
    scale = 0.02
    params = {
        "wq": scale * jax.random.normal(keys[3], (H, H), dtype=jnp.float32),
        "bq": scale * jax.random.normal(keys[4], (H,), dtype=jnp.float32),
        "wk": scale * jax.random.normal(keys[5], (H, H), dtype=jnp.float32),
        "bk": scale * jax.random.normal(keys[6], (H,), dtype=jnp.float32),
        "wv": scale * jax.random.normal(keys[7], (H, H), dtype=jnp.float32),
        "bv": scale * jax.random.normal(keys[8], (H,), dtype=jnp.float32),
        "wo": scale * jax.random.normal(keys[9], (H, H), dtype=jnp.float32),
        "bo": scale * jax.random.normal(keys[10], (H,), dtype=jnp.float32),
        "gamma": jnp.ones((H,), dtype=jnp.float32),
        "beta": jnp.zeros((H,), dtype=jnp.float32),
    }
    return s1, s2, mask, params


if __name__ == "__main__":
    key = jax.random.PRNGKey(0)
    k1, k2 = jax.random.split(key)

    # --- Test 1: small module-consistent shapes ---------------------------
    B, S1, S2, H, NH = 2, 8, 16, 32, 4
    s1, s2, mask, params = _make_inputs(k1, B, S1, S2, H)
    ref = _reference(s1, s2, mask, params, num_heads=NH)

    # High-precision path (f32 MXU operands, exact softmax divide).
    out_f32 = bert_cross_attention(s1, s2, mask, params, num_heads=NH,
                                   matmul_dtype=jnp.float32)
    out_f32 = jax.block_until_ready(out_f32)
    assert out_f32.shape == (B, S1, H)
    err32 = float(jnp.max(jnp.abs(out_f32 - ref)))
    assert jnp.allclose(out_f32, ref, atol=2e-3, rtol=2e-3), err32

    # Production path (bf16 MXU operands, f32 accumulation).
    out_bf16 = bert_cross_attention(s1, s2, mask, params, num_heads=NH,
                                    matmul_dtype=jnp.bfloat16)
    out_bf16 = jax.block_until_ready(out_bf16)
    errbf = float(jnp.max(jnp.abs(out_bf16 - ref)))
    assert jnp.allclose(out_bf16, ref, atol=7e-2, rtol=7e-2), errbf

    # --- Test 2: exercise the multi-tile (qi) grid and head_size=64 -------
    B2, S1b, S2b, H2, NH2 = 2, 64, 48, 128, 2
    s1b, s2b, maskb, paramsb = _make_inputs(k2, B2, S1b, S2b, H2)
    refb = _reference(s1b, s2b, maskb, paramsb, num_heads=NH2)
    outb = bert_cross_attention(s1b, s2b, maskb, paramsb, num_heads=NH2,
                                matmul_dtype=jnp.float32, tq=32)
    outb = jax.block_until_ready(outb)
    errb = float(jnp.max(jnp.abs(outb - refb)))
    assert jnp.allclose(outb, refb, atol=2e-3, rtol=2e-3), errb

    print("KERNEL_OK")
</pallas_src>

<mosaic_0001>
module attributes {stable_mosaic.version = 11 : i64} {
  func.func @_cross_attn_kernel(%arg0: i32, %arg1: i32, %arg2: memref<1x8x32xf32, #tpu.memory_space<vmem>>, %arg3: memref<1x4x8x8xf32, #tpu.memory_space<vmem>>, %arg4: memref<1x4x16x8xf32, #tpu.memory_space<vmem>>, %arg5: memref<1x4x16x8xf32, #tpu.memory_space<vmem>>, %arg6: memref<1x1x16xf32, #tpu.memory_space<vmem>>, %arg7: memref<4x8x32xf32, #tpu.memory_space<vmem>>, %arg8: memref<1x32xf32, #tpu.memory_space<vmem>>, %arg9: memref<1x32xf32, #tpu.memory_space<vmem>>, %arg10: memref<1x32xf32, #tpu.memory_space<vmem>>, %arg11: memref<1x8x32xf32, #tpu.memory_space<vmem>>) attributes {dimension_semantics = [#tpu.dimension_semantics<parallel>, #tpu.dimension_semantics<parallel>], iteration_bounds = array<i64: 2, 1>, scalar_prefetch = 0 : i64, scratch_operands = 0 : i64, tpu.core_type = #tpu.core_type<tc>, window_params = [{transform_indices = @transform_0, window_bounds = array<i64: 1, 8, 32>}, {transform_indices = @transform_1, window_bounds = array<i64: 1, 4, 8, 8>}, {transform_indices = @transform_2, window_bounds = array<i64: 1, 4, 16, 8>}, {transform_indices = @transform_3, window_bounds = array<i64: 1, 4, 16, 8>}, {transform_indices = @transform_4, window_bounds = array<i64: 1, 1, 16>}, {pipeline_mode = #tpu.pipeline_mode<synchronous>, transform_indices = @transform_5, window_bounds = array<i64: 4, 8, 32>}, {pipeline_mode = #tpu.pipeline_mode<synchronous>, transform_indices = @transform_6, window_bounds = array<i64: 1, 32>}, {pipeline_mode = #tpu.pipeline_mode<synchronous>, transform_indices = @transform_7, window_bounds = array<i64: 1, 32>}, {pipeline_mode = #tpu.pipeline_mode<synchronous>, transform_indices = @transform_8, window_bounds = array<i64: 1, 32>}, {transform_indices = @transform_9, window_bounds = array<i64: 1, 8, 32>}]} {
    %c0 = arith.constant 0 : index
    %c0_0 = arith.constant 0 : index
    %c0_1 = arith.constant 0 : index
    %0 = vector.load %arg2[%c0, %c0_0, %c0_1] : memref<1x8x32xf32, #tpu.memory_space<vmem>>, vector<1x8x32xf32>
    %1 = vector.shape_cast %0 : vector<1x8x32xf32> to vector<8x32xf32>
    %c0_2 = arith.constant 0 : index
    %c0_3 = arith.constant 0 : index
    %c0_4 = arith.constant 0 : index
    %c0_5 = arith.constant 0 : index
    %2 = vector.load %arg3[%c0_2, %c0_3, %c0_4, %c0_5] : memref<1x4x8x8xf32, #tpu.memory_space<vmem>>, vector<1x4x8x8xf32>
    %3 = vector.shape_cast %2 : vector<1x4x8x8xf32> to vector<4x8x8xf32>
    %c0_6 = arith.constant 0 : index
    %c0_7 = arith.constant 0 : index
    %c0_8 = arith.constant 0 : index
    %c0_9 = arith.constant 0 : index
    %4 = vector.load %arg4[%c0_6, %c0_7, %c0_8, %c0_9] : memref<1x4x16x8xf32, #tpu.memory_space<vmem>>, vector<1x4x16x8xf32>
    %5 = vector.shape_cast %4 : vector<1x4x16x8xf32> to vector<4x16x8xf32>
    %c0_10 = arith.constant 0 : index
    %c0_11 = arith.constant 0 : index
    %c0_12 = arith.constant 0 : index
    %c0_13 = arith.constant 0 : index
    %6 = vector.load %arg5[%c0_10, %c0_11, %c0_12, %c0_13] : memref<1x4x16x8xf32, #tpu.memory_space<vmem>>, vector<1x4x16x8xf32>
    %7 = vector.shape_cast %6 : vector<1x4x16x8xf32> to vector<4x16x8xf32>
    %c0_14 = arith.constant 0 : index
    %c0_15 = arith.constant 0 : index
    %c0_16 = arith.constant 0 : index
    %8 = vector.load %arg6[%c0_14, %c0_15, %c0_16] : memref<1x1x16xf32, #tpu.memory_space<vmem>>, vector<1x1x16xf32>
    %9 = vector.shape_cast %8 : vector<1x1x16xf32> to vector<1x16xf32>
    %cst = arith.constant dense<0.000000e+00> : vector<4x8x16xf32>
    %10 = tpu.matmul %3, %5, %cst {dimension_numbers = #tpu.dot_dimension_numbers<[2], [2], [1], [1], [0, 0, 0, 1, 1, 1], [0], [0]>} : vector<4x8x8xf32>, vector<4x16x8xf32>, vector<4x8x16xf32> -> vector<4x8x16xf32>
    %11 = vector.shape_cast %9 : vector<1x16xf32> to vector<1x1x16xf32>
    %12 = vector.broadcast %11 : vector<1x1x16xf32> to vector<4x8x16xf32>
    %13 = arith.addf %10, %12 : vector<4x8x16xf32>
    %cst_17 = arith.constant dense<0xFF800000> : vector<4x8xf32>
    %14 = vector.multi_reduction <maximumf>, %13, %cst_17 [2] : vector<4x8x16xf32> to vector<4x8xf32>
    %15 = vector.shape_cast %14 : vector<4x8xf32> to vector<4x8x1xf32>
    %16 = vector.broadcast %15 : vector<4x8x1xf32> to vector<4x8x16xf32>
    %17 = arith.subf %13, %16 : vector<4x8x16xf32>
    %18 = math.exp %17 : vector<4x8x16xf32>
    %cst_18 = arith.constant dense<0.000000e+00> : vector<4x8xf32>
    %19 = vector.multi_reduction <add>, %18, %cst_18 [2] : vector<4x8x16xf32> to vector<4x8xf32>
    %20 = vector.shape_cast %19 : vector<4x8xf32> to vector<4x8x1xf32>
    %21 = vector.broadcast %20 : vector<4x8x1xf32> to vector<4x8x16xf32>
    %22 = arith.divf %18, %21 : vector<4x8x16xf32>
    %cst_19 = arith.constant dense<0.000000e+00> : vector<4x8x8xf32>
    %23 = tpu.matmul %22, %7, %cst_19 {dimension_numbers = #tpu.dot_dimension_numbers<[2], [1], [1], [2], [0, 0, 0, 1, 1, 2], [0], [0]>} : vector<4x8x16xf32>, vector<4x16x8xf32>, vector<4x8x8xf32> -> vector<4x8x8xf32>
    %24 = vector.extract_strided_slice %23 {offsets = [0, 0, 0], sizes = [1, 8, 8], strides = [1, 1, 1]} : vector<4x8x8xf32> to vector<1x8x8xf32>
    %25 = vector.shape_cast %24 : vector<1x8x8xf32> to vector<8x8xf32>
    %c0_20 = arith.constant 0 : index
    %c0_21 = arith.constant 0 : index
    %c0_22 = arith.constant 0 : index
    %26 = vector.load %arg7[%c0_20, %c0_21, %c0_22] : memref<4x8x32xf32, #tpu.memory_space<vmem>>, vector<1x8x32xf32>
    %27 = vector.shape_cast %26 : vector<1x8x32xf32> to vector<8x32xf32>
    %cst_23 = arith.constant dense<0.000000e+00> : vector<8x32xf32>
    %28 = tpu.matmul %25, %27, %cst_23 {dimension_numbers = #tpu.dot_dimension_numbers<[1], [0], [0], [1], [0, 0, 1, 1], [], []>} : vector<8x8xf32>, vector<8x32xf32>, vector<8x32xf32> -> vector<8x32xf32>
    %29 = vector.extract_strided_slice %23 {offsets = [1, 0, 0], sizes = [1, 8, 8], strides = [1, 1, 1]} : vector<4x8x8xf32> to vector<1x8x8xf32>
    %30 = vector.shape_cast %29 : vector<1x8x8xf32> to vector<8x8xf32>
    %c1 = arith.constant 1 : index
    %c0_24 = arith.constant 0 : index
    %c0_25 = arith.constant 0 : index
    %31 = vector.load %arg7[%c1, %c0_24, %c0_25] : memref<4x8x32xf32, #tpu.memory_space<vmem>>, vector<1x8x32xf32>
    %32 = vector.shape_cast %31 : vector<1x8x32xf32> to vector<8x32xf32>
    %cst_26 = arith.constant dense<0.000000e+00> : vector<8x32xf32>
    %33 = tpu.matmul %30, %32, %cst_26 {dimension_numbers = #tpu.dot_dimension_numbers<[1], [0], [0], [1], [0, 0, 1, 1], [], []>} : vector<8x8xf32>, vector<8x32xf32>, vector<8x32xf32> -> vector<8x32xf32>
    %34 = arith.addf %28, %33 : vector<8x32xf32>
    %35 = vector.extract_strided_slice %23 {offsets = [2, 0, 0], sizes = [1, 8, 8], strides = [1, 1, 1]} : vector<4x8x8xf32> to vector<1x8x8xf32>
    %36 = vector.shape_cast %35 : vector<1x8x8xf32> to vector<8x8xf32>
    %c2 = arith.constant 2 : index
    %c0_27 = arith.constant 0 : index
    %c0_28 = arith.constant 0 : index
    %37 = vector.load %arg7[%c2, %c0_27, %c0_28] : memref<4x8x32xf32, #tpu.memory_space<vmem>>, vector<1x8x32xf32>
    %38 = vector.shape_cast %37 : vector<1x8x32xf32> to vector<8x32xf32>
    %cst_29 = arith.constant dense<0.000000e+00> : vector<8x32xf32>
    %39 = tpu.matmul %36, %38, %cst_29 {dimension_numbers = #tpu.dot_dimension_numbers<[1], [0], [0], [1], [0, 0, 1, 1], [], []>} : vector<8x8xf32>, vector<8x32xf32>, vector<8x32xf32> -> vector<8x32xf32>
    %40 = arith.addf %34, %39 : vector<8x32xf32>
    %41 = vector.extract_strided_slice %23 {offsets = [3, 0, 0], sizes = [1, 8, 8], strides = [1, 1, 1]} : vector<4x8x8xf32> to vector<1x8x8xf32>
    %42 = vector.shape_cast %41 : vector<1x8x8xf32> to vector<8x8xf32>
    %c3 = arith.constant 3 : index
    %c0_30 = arith.constant 0 : index
    %c0_31 = arith.constant 0 : index
    %43 = vector.load %arg7[%c3, %c0_30, %c0_31] : memref<4x8x32xf32, #tpu.memory_space<vmem>>, vector<1x8x32xf32>
    %44 = vector.shape_cast %43 : vector<1x8x32xf32> to vector<8x32xf32>
    %cst_32 = arith.constant dense<0.000000e+00> : vector<8x32xf32>
    %45 = tpu.matmul %42, %44, %cst_32 {dimension_numbers = #tpu.dot_dimension_numbers<[1], [0], [0], [1], [0, 0, 1, 1], [], []>} : vector<8x8xf32>, vector<8x32xf32>, vector<8x32xf32> -> vector<8x32xf32>
    %46 = arith.addf %40, %45 : vector<8x32xf32>
    %c0_33 = arith.constant 0 : index
    %c0_34 = arith.constant 0 : index
    %47 = vector.load %arg8[%c0_33, %c0_34] : memref<1x32xf32, #tpu.memory_space<vmem>>, vector<1x32xf32>
    %48 = vector.broadcast %47 : vector<1x32xf32> to vector<8x32xf32>
    %49 = arith.addf %46, %48 : vector<8x32xf32>
    %50 = arith.addf %49, %1 : vector<8x32xf32>
    %cst_35 = arith.constant dense<0.000000e+00> : vector<8xf32>
    %51 = vector.multi_reduction <add>, %50, %cst_35 [1] : vector<8x32xf32> to vector<8xf32>
    %52 = vector.shape_cast %51 : vector<8xf32> to vector<8x1xf32>
    %cst_36 = arith.constant 3.200000e+01 : f32
    %53 = vector.broadcast %cst_36 : f32 to vector<8x1xf32>
    %54 = arith.divf %52, %53 : vector<8x1xf32>
    %55 = vector.broadcast %54 : vector<8x1xf32> to vector<8x32xf32>
    %56 = arith.subf %50, %55 : vector<8x32xf32>
    %57 = arith.mulf %56, %56 : vector<8x32xf32>
    %cst_37 = arith.constant dense<0.000000e+00> : vector<8xf32>
    %58 = vector.multi_reduction <add>, %57, %cst_37 [1] : vector<8x32xf32> to vector<8xf32>
    %59 = vector.shape_cast %58 : vector<8xf32> to vector<8x1xf32>
    %cst_38 = arith.constant 3.200000e+01 : f32
    %60 = vector.broadcast %cst_38 : f32 to vector<8x1xf32>
    %61 = arith.divf %59, %60 : vector<8x1xf32>
    %cst_39 = arith.constant 9.99999996E-13 : f32
    %62 = vector.broadcast %cst_39 : f32 to vector<8x1xf32>
    %63 = arith.addf %61, %62 : vector<8x1xf32>
    %64 = math.rsqrt %63 : vector<8x1xf32>
    %65 = vector.broadcast %64 : vector<8x1xf32> to vector<8x32xf32>
    %66 = arith.mulf %56, %65 : vector<8x32xf32>
    %c0_40 = arith.constant 0 : index
    %c0_41 = arith.constant 0 : index
    %67 = vector.load %arg9[%c0_40, %c0_41] : memref<1x32xf32, #tpu.memory_space<vmem>>, vector<1x32xf32>
    %68 = vector.broadcast %67 : vector<1x32xf32> to vector<8x32xf32>
    %69 = arith.mulf %66, %68 : vector<8x32xf32>
    %c0_42 = arith.constant 0 : index
    %c0_43 = arith.constant 0 : index
    %70 = vector.load %arg10[%c0_42, %c0_43] : memref<1x32xf32, #tpu.memory_space<vmem>>, vector<1x32xf32>
    %71 = vector.broadcast %70 : vector<1x32xf32> to vector<8x32xf32>
    %72 = arith.addf %69, %71 : vector<8x32xf32>
    %c0_44 = arith.constant 0 : index
    %c0_45 = arith.constant 0 : index
    %c0_46 = arith.constant 0 : index
    %73 = vector.load %arg11[%c0_44, %c0_45, %c0_46] : memref<1x8x32xf32, #tpu.memory_space<vmem>>, vector<1x8x32xf32>
    %74 = vector.shape_cast %73 : vector<1x8x32xf32> to vector<8x32xf32>
    %75 = vector.shape_cast %72 : vector<8x32xf32> to vector<1x8x32xf32>
    tpu.vector_store %arg11[%c0_44, %c0_45, %c0_46], %75 {strides = array<i32>} : memref<1x8x32xf32, #tpu.memory_space<vmem>>, vector<1x8x32xf32>,
    return
  }
  func.func @transform_0(%arg0: i32, %arg1: i32) -> (i32, i32, i32) {
    %c0_i32 = arith.constant 0 : i32
    %c0_i32_0 = arith.constant 0 : i32
    return %arg0, %arg1, %c0_i32 : i32, i32, i32
  }
  func.func @transform_1(%arg0: i32, %arg1: i32) -> (i32, i32, i32, i32) {
    %c0_i32 = arith.constant 0 : i32
    %c0_i32_0 = arith.constant 0 : i32
    %c0_i32_1 = arith.constant 0 : i32
    return %arg0, %c0_i32, %arg1, %c0_i32_0 : i32, i32, i32, i32
  }
  func.func @transform_2(%arg0: i32, %arg1: i32) -> (i32, i32, i32, i32) {
    %c0_i32 = arith.constant 0 : i32
    %c0_i32_0 = arith.constant 0 : i32
    %c0_i32_1 = arith.constant 0 : i32
    %c0_i32_2 = arith.constant 0 : i32
    return %arg0, %c0_i32, %c0_i32_0, %c0_i32_1 : i32, i32, i32, i32
  }
  func.func @transform_3(%arg0: i32, %arg1: i32) -> (i32, i32, i32, i32) {
    %c0_i32 = arith.constant 0 : i32
    %c0_i32_0 = arith.constant 0 : i32
    %c0_i32_1 = arith.constant 0 : i32
    %c0_i32_2 = arith.constant 0 : i32
    return %arg0, %c0_i32, %c0_i32_0, %c0_i32_1 : i32, i32, i32, i32
  }
  func.func @transform_4(%arg0: i32, %arg1: i32) -> (i32, i32, i32) {
    %c0_i32 = arith.constant 0 : i32
    %c0_i32_0 = arith.constant 0 : i32
    %c0_i32_1 = arith.constant 0 : i32
    return %arg0, %c0_i32, %c0_i32_0 : i32, i32, i32
  }
  func.func @transform_5(%arg0: i32, %arg1: i32) -> (i32, i32, i32) {
    %c0_i32 = arith.constant 0 : i32
    %c0_i32_0 = arith.constant 0 : i32
    %c0_i32_1 = arith.constant 0 : i32
    %c0_i32_2 = arith.constant 0 : i32
    return %c0_i32, %c0_i32_0, %c0_i32_1 : i32, i32, i32
  }
  func.func @transform_6(%arg0: i32, %arg1: i32) -> (i32, i32) {
    %c0_i32 = arith.constant 0 : i32
    %c0_i32_0 = arith.constant 0 : i32
    %c0_i32_1 = arith.constant 0 : i32
    return %c0_i32, %c0_i32_0 : i32, i32
  }
  func.func @transform_7(%arg0: i32, %arg1: i32) -> (i32, i32) {
    %c0_i32 = arith.constant 0 : i32
    %c0_i32_0 = arith.constant 0 : i32
    %c0_i32_1 = arith.constant 0 : i32
    return %c0_i32, %c0_i32_0 : i32, i32
  }
  func.func @transform_8(%arg0: i32, %arg1: i32) -> (i32, i32) {
    %c0_i32 = arith.constant 0 : i32
    %c0_i32_0 = arith.constant 0 : i32
    %c0_i32_1 = arith.constant 0 : i32
    return %c0_i32, %c0_i32_0 : i32, i32
  }
  func.func @transform_9(%arg0: i32, %arg1: i32) -> (i32, i32, i32) {
    %c0_i32 = arith.constant 0 : i32
    %c0_i32_0 = arith.constant 0 : i32
    return %arg0, %arg1, %c0_i32 : i32, i32, i32
  }
}

</mosaic_0001>

<llo_original>
// kernel: tpu_custom_call.1
$region0: #{tpu_custom_call.1}
  #allocation0 [shape = 'u32[]', space=smem, size = 0x4, offset = 0x4, fixed_abs, tag = 'smem constant byte address 0x4 - core index']
  #allocation1 [shape = 'u32[144,128]{1,0:T(1,128)}', space=vmem, size = 0x12000, scoped, tag = 'internal scratch']
  %s0 = inlined_call_operand.vmem [shape: f32[2,8,32], index: 0, kind: input, shape index: {}]
  %s1 = inlined_call_operand.vmem [shape: f32[2,4,8,8], index: 1, kind: input, shape index: {}]
  %s2 = inlined_call_operand.vmem [shape: f32[2,4,16,8], index: 2, kind: input, shape index: {}]
  %s3 = inlined_call_operand.vmem [shape: f32[2,4,16,8], index: 3, kind: input, shape index: {}]
  %s4 = inlined_call_operand.vmem [shape: f32[2,1,16], index: 4, kind: input, shape index: {}]
  %s5 = inlined_call_operand.vmem [shape: f32[4,8,32], index: 5, kind: input, shape index: {}]
  %s6 = inlined_call_operand.vmem [shape: f32[1,32], index: 6, kind: input, shape index: {}]
  %s7 = inlined_call_operand.vmem [shape: f32[1,32], index: 7, kind: input, shape index: {}]
  %s8 = inlined_call_operand.vmem [shape: f32[1,32], index: 8, kind: input, shape index: {}]
  %s9 = inlined_call_operand.hbm [shape: f32[2,8,32], index: 9, kind: output, shape index: {}]
  %s10 = sld [smem:[#allocation0]]
  $region69: #{tpu_custom_call.1} parent=0
    _
  %s12 = ssub.s32 1, %s10
  %s13 = scalar_select 0, %s12, %s10
  $region1: #{tpu_custom_call.1} parent=0
    #allocation2 [shape = 'u8[8192]{0}', space=vmem, size = 0x2000, scoped, tag = 'output window, operand 0']
    #allocation3 [shape = 's32[2]{0}', space=sflag, size = 0x8, scoped, tag = 'scoped memory for tpu_custom_call.1']
    %14 = vsyncpa [#allocation3], 0
    %s15 = scalar_lea.sflag [#allocation3], 1
    %16 = vsyncpa %s15, 0
    loop: start=0, step=1, limit=4
    $region2: #{tpu_custom_call.1} parent=1 // loop_pre_header
      _
    $region3: #{tpu_custom_call.1} parent=1 // loop_header
      %s18 = sphi 0, %s22
      %p19 = scmp.ge.s32.totalorder %s18, 4
      %s25 = sphi 0, %s37
      %s26 = sphi 0, %s33
      %s27 = sphi 0, %s25
      %s28 = sphi 0, %s26
      %s29 = sphi 0, %s27
      %s30 = sphi 0, %s28
      %s42 = sphi 0, %s44
      %s45 = sphi 0, %s42
      %s46 = sphi 0, %s45
      %s62 = sphi 0, %s46
      %s70 = sphi 0, %s72
      %s73 = sphi 0, %s70
      %s74 = sphi 0, %s73
      %s90 = sphi 0, %s74
      %s96 = sphi 0, %s98
      %s99 = sphi 0, %s96
      %s100 = sphi 0, %s99
      %s116 = sphi 0, %s100
      %s122 = sphi 0, %s124
      %s125 = sphi 0, %s122
      %s126 = sphi 0, %s125
      %s142 = sphi 0, %s126
      %s148 = sphi 0, %s150
      %s151 = sphi 0, %s148
      %s152 = sphi 0, %s151
      %s168 = sphi 0, %s152
      %s172 = sphi 0, %s172
      %s174 = sphi 0, %s172
      %s175 = sphi 0, %s174
      %s189 = sphi 0, %s175
      %s193 = sphi 0, %s193
      %s195 = sphi 0, %s193
      %s196 = sphi 0, %s195
      %s210 = sphi 0, %s196
      %s214 = sphi 0, %s214
      %s216 = sphi 0, %s214
      %s217 = sphi 0, %s216
      %s231 = sphi 0, %s217
      %s235 = sphi 0, %s235
      %s237 = sphi 0, %s235
      %s238 = sphi 0, %s237
      %s252 = sphi 0, %s238
      %s260 = sphi 0, %s262
      %s263 = sphi 0, %s260
      %s264 = sphi 0, %s263
      %s280 = sphi 0, %s264
    $region4: #{tpu_custom_call.1} parent=1 // loop_header_branch
      %21 = sbr.rel (%p19) target = $region8
    $region5: #{tpu_custom_call.1} parent=1 // loop_body
      %s23 = ssub.s32 %s18, 1
      %s24 = ssub.s32 %s18, 2
      %s31 = sadd.s32 1, %s26
      %p32 = scmp.ge.s32.totalorder %s31, 1
      %s33 = scalar_select %p32, 0, %s31
      %s34 = sadd.s32 1, %s25
      %s35 = scalar_select %p32, %s34, %s25
      %p36 = scmp.ge.s32.totalorder %s35, 2
      %s37 = scalar_select %p36, 0, %s35
      %s38 = ssub.s32 %s25, %s37
      %s39 = ssub.s32 %s26, %s33
      %s40 = sor.u32 %s38, %s39
      %p41 = scmp.eq.s32.totalorder %s40, 0
      %s43 = sadd.s32 %s42, 1
      %s44 = scalar_select %p41, %s42, %s43
      %p47 = pneg %p41
      %p48 = scmp.eq.s32.totalorder %s18, 1
      %p49 = por %p47, %p48
      %p50 = scmp.ne.s32.totalorder %s42, %s45
      %p51 = scmp.eq.s32.totalorder %s18, 0
      %p52 = por %p50, %p51
      %p53 = scmp.ne.s32.totalorder %s42, %s45
      %p54 = scmp.eq.s32.totalorder %s23, 1
      %p55 = por %p53, %p54
      %p56 = scmp.ne.s32.totalorder %s45, %s46
      %p57 = scmp.eq.s32.totalorder %s23, 0
      %p58 = por %p56, %p57
      %p59 = scmp.ne.s32.totalorder %s45, %s46
      %p60 = scmp.eq.s32.totalorder %s24, 1
      %p61 = por %p59, %p60
      %p63 = scmp.ne.s32.totalorder %s46, %s62
      %p64 = scmp.eq.s32.totalorder %s24, 0
      %p65 = por %p63, %p64
      %s66 = ssub.s32 %s25, %s37
      %s67 = ssub.s32 %s26, %s33
      %s68 = sor.u32 %s66, %s67
      %p69 = scmp.eq.s32.totalorder %s68, 0
      %s71 = sadd.s32 %s70, 1
      %s72 = scalar_select %p69, %s70, %s71
      %p75 = pneg %p69
      %p76 = scmp.eq.s32.totalorder %s18, 1
      %p77 = por %p75, %p76
      %p78 = scmp.ne.s32.totalorder %s70, %s73
      %p79 = scmp.eq.s32.totalorder %s18, 0
      %p80 = por %p78, %p79
      %p81 = scmp.ne.s32.totalorder %s70, %s73
      %p82 = scmp.eq.s32.totalorder %s23, 1
      %p83 = por %p81, %p82
      %p84 = scmp.ne.s32.totalorder %s73, %s74
      %p85 = scmp.eq.s32.totalorder %s23, 0
      %p86 = por %p84, %p85
      %p87 = scmp.ne.s32.totalorder %s73, %s74
      %p88 = scmp.eq.s32.totalorder %s24, 1
      %p89 = por %p87, %p88
      %p91 = scmp.ne.s32.totalorder %s74, %s90
      %p92 = scmp.eq.s32.totalorder %s24, 0
      %p93 = por %p91, %p92
      %s94 = ssub.s32 %s25, %s37
      %p95 = scmp.eq.s32.totalorder %s94, 0
      %s97 = sadd.s32 %s96, 1
      %s98 = scalar_select %p95, %s96, %s97
      %p101 = pneg %p95
      %p102 = scmp.eq.s32.totalorder %s18, 1
      %p103 = por %p101, %p102
      %p104 = scmp.ne.s32.totalorder %s96, %s99
      %p105 = scmp.eq.s32.totalorder %s18, 0
      %p106 = por %p104, %p105
      %p107 = scmp.ne.s32.totalorder %s96, %s99
      %p108 = scmp.eq.s32.totalorder %s23, 1
      %p109 = por %p107, %p108
      %p110 = scmp.ne.s32.totalorder %s99, %s100
      %p111 = scmp.eq.s32.totalorder %s23, 0
      %p112 = por %p110, %p111
      %p113 = scmp.ne.s32.totalorder %s99, %s100
      %p114 = scmp.eq.s32.totalorder %s24, 1
      %p115 = por %p113, %p114
      %p117 = scmp.ne.s32.totalorder %s100, %s116
      %p118 = scmp.eq.s32.totalorder %s24, 0
      %p119 = por %p117, %p118
      %s120 = ssub.s32 %s25, %s37
      %p121 = scmp.eq.s32.totalorder %s120, 0
      %s123 = sadd.s32 %s122, 1
      %s124 = scalar_select %p121, %s122, %s123
      %p127 = pneg %p121
      %p128 = scmp.eq.s32.totalorder %s18, 1
      %p129 = por %p127, %p128
      %p130 = scmp.ne.s32.totalorder %s122, %s125
      %p131 = scmp.eq.s32.totalorder %s18, 0
      %p132 = por %p130, %p131
      %p133 = scmp.ne.s32.totalorder %s122, %s125
      %p134 = scmp.eq.s32.totalorder %s23, 1
      %p135 = por %p133, %p134
      %p136 = scmp.ne.s32.totalorder %s125, %s126
      %p137 = scmp.eq.s32.totalorder %s23, 0
      %p138 = por %p136, %p137
      %p139 = scmp.ne.s32.totalorder %s125, %s126
      %p140 = scmp.eq.s32.totalorder %s24, 1
      %p141 = por %p139, %p140
      %p143 = scmp.ne.s32.totalorder %s126, %s142
      %p144 = scmp.eq.s32.totalorder %s24, 0
      %p145 = por %p143, %p144
      %s146 = ssub.s32 %s25, %s37
      %p147 = scmp.eq.s32.totalorder %s146, 0
      %s149 = sadd.s32 %s148, 1
      %s150 = scalar_select %p147, %s148, %s149
      %p153 = pneg %p147
      %p154 = scmp.eq.s32.totalorder %s18, 1
      %p155 = por %p153, %p154
      %p156 = scmp.ne.s32.totalorder %s148, %s151
      %p157 = scmp.eq.s32.totalorder %s18, 0
      %p158 = por %p156, %p157
      %p159 = scmp.ne.s32.totalorder %s148, %s151
      %p160 = scmp.eq.s32.totalorder %s23, 1
      %p161 = por %p159, %p160
      %p162 = scmp.ne.s32.totalorder %s151, %s152
      %p163 = scmp.eq.s32.totalorder %s23, 0
      %p164 = por %p162, %p163
      %p165 = scmp.ne.s32.totalorder %s151, %s152
      %p166 = scmp.eq.s32.totalorder %s24, 1
      %p167 = por %p165, %p166
      %p169 = scmp.ne.s32.totalorder %s152, %s168
      %p170 = scmp.eq.s32.totalorder %s24, 0
      %p171 = por %p169, %p170
      %s173 = sadd.s32 %s172, 1
      %p176 = scmp.eq.s32.totalorder %s18, 1
      %p177 = scmp.ne.s32.totalorder %s172, %s174
      %p178 = scmp.eq.s32.totalorder %s18, 0
      %p179 = por %p177, %p178
      %p180 = scmp.ne.s32.totalorder %s172, %s174
      %p181 = scmp.eq.s32.totalorder %s23, 1
      %p182 = por %p180, %p181
      %p183 = scmp.ne.s32.totalorder %s174, %s175
      %p184 = scmp.eq.s32.totalorder %s23, 0
      %p185 = por %p183, %p184
      %p186 = scmp.ne.s32.totalorder %s174, %s175
      %p187 = scmp.eq.s32.totalorder %s24, 1
      %p188 = por %p186, %p187
      %p190 = scmp.ne.s32.totalorder %s175, %s189
      %p191 = scmp.eq.s32.totalorder %s24, 0
      %p192 = por %p190, %p191
      %s194 = sadd.s32 %s193, 1
      %p197 = scmp.eq.s32.totalorder %s18, 1
      %p198 = scmp.ne.s32.totalorder %s193, %s195
      %p199 = scmp.eq.s32.totalorder %s18, 0
      %p200 = por %p198, %p199
      %p201 = scmp.ne.s32.totalorder %s193, %s195
      %p202 = scmp.eq.s32.totalorder %s23, 1
      %p203 = por %p201, %p202
      %p204 = scmp.ne.s32.totalorder %s195, %s196
      %p205 = scmp.eq.s32.totalorder %s23, 0
      %p206 = por %p204, %p205
      %p207 = scmp.ne.s32.totalorder %s195, %s196
      %p208 = scmp.eq.s32.totalorder %s24, 1
      %p209 = por %p207, %p208
      %p211 = scmp.ne.s32.totalorder %s196, %s210
      %p212 = scmp.eq.s32.totalorder %s24, 0
      %p213 = por %p211, %p212
      %s215 = sadd.s32 %s214, 1
      %p218 = scmp.eq.s32.totalorder %s18, 1
      %p219 = scmp.ne.s32.totalorder %s214, %s216
      %p220 = scmp.eq.s32.totalorder %s18, 0
      %p221 = por %p219, %p220
      %p222 = scmp.ne.s32.totalorder %s214, %s216
      %p223 = scmp.eq.s32.totalorder %s23, 1
      %p224 = por %p222, %p223
      %p225 = scmp.ne.s32.totalorder %s216, %s217
      %p226 = scmp.eq.s32.totalorder %s23, 0
      %p227 = por %p225, %p226
      %p228 = scmp.ne.s32.totalorder %s216, %s217
      %p229 = scmp.eq.s32.totalorder %s24, 1
      %p230 = por %p228, %p229
      %p232 = scmp.ne.s32.totalorder %s217, %s231
      %p233 = scmp.eq.s32.totalorder %s24, 0
      %p234 = por %p232, %p233
      %s236 = sadd.s32 %s235, 1
      %p239 = scmp.eq.s32.totalorder %s18, 1
      %p240 = scmp.ne.s32.totalorder %s235, %s237
      %p241 = scmp.eq.s32.totalorder %s18, 0
      %p242 = por %p240, %p241
      %p243 = scmp.ne.s32.totalorder %s235, %s237
      %p244 = scmp.eq.s32.totalorder %s23, 1
      %p245 = por %p243, %p244
      %p246 = scmp.ne.s32.totalorder %s237, %s238
      %p247 = scmp.eq.s32.totalorder %s23, 0
      %p248 = por %p246, %p247
      %p249 = scmp.ne.s32.totalorder %s237, %s238
      %p250 = scmp.eq.s32.totalorder %s24, 1
      %p251 = por %p249, %p250
      %p253 = scmp.ne.s32.totalorder %s238, %s252
      %p254 = scmp.eq.s32.totalorder %s24, 0
      %p255 = por %p253, %p254
      %s256 = ssub.s32 %s25, %s37
      %s257 = ssub.s32 %s26, %s33
      %s258 = sor.u32 %s256, %s257
      %p259 = scmp.eq.s32.totalorder %s258, 0
      %s261 = sadd.s32 %s260, 1
      %s262 = scalar_select %p259, %s260, %s261
      %p265 = pneg %p259
      %p266 = scmp.eq.s32.totalorder %s18, 1
      %p267 = por %p265, %p266
      %p268 = scmp.ne.s32.totalorder %s260, %s263
      %p269 = scmp.eq.s32.totalorder %s18, 0
      %p270 = por %p268, %p269
      %p271 = scmp.ne.s32.totalorder %s260, %s263
      %p272 = scmp.eq.s32.totalorder %s23, 1
      %p273 = por %p271, %p272
      %p274 = scmp.ne.s32.totalorder %s263, %s264
      %p275 = scmp.eq.s32.totalorder %s23, 0
      %p276 = por %p274, %p275
      %p277 = scmp.ne.s32.totalorder %s263, %s264
      %p278 = scmp.eq.s32.totalorder %s24, 1
      %p279 = por %p277, %p278
      %p281 = scmp.ne.s32.totalorder %s264, %s280
      %p282 = scmp.eq.s32.totalorder %s24, 0
      %p283 = por %p281, %p282
      %p284 = scmp.le.s32.totalorder 1, %s18
      %p285 = scmp.lt.s32.totalorder %s18, 3
      %p286 = pnand %p284, %p285
      %p287 = pneg %p286
      // Predicated region
      $region9: #{tpu_custom_call.1} parent=5 // pred_check
        _
      $region10: #{tpu_custom_call.1} parent=5 // pred_check_branch
        %289 = sbr.rel (%p286) target = $region12
      $region11: #{tpu_custom_call.1} parent=5 // pred_region
        %s290 = ssub.s32 %s18, 1
        // Predicated region
        $region13: #{tpu_custom_call.1} parent=11 // pred_check
          %p291 = pneg %p185
        $region14: #{tpu_custom_call.1} parent=11 // pred_check_branch
          %293 = sbr.rel (%p291) target = $region16
        $region15: #{tpu_custom_call.1} parent=11 // pred_region
          _
        $region16: #{tpu_custom_call.1} parent=11 // pred_fallthru
          _
        // Predicated region
        $region17: #{tpu_custom_call.1} parent=11 // pred_check
          %p294 = pneg %p206
        $region18: #{tpu_custom_call.1} parent=11 // pred_check_branch
          %296 = sbr.rel (%p294) target = $region20
        $region19: #{tpu_custom_call.1} parent=11 // pred_region
          _
        $region20: #{tpu_custom_call.1} parent=11 // pred_fallthru
          _
        // Predicated region
        $region21: #{tpu_custom_call.1} parent=11 // pred_check
          %p297 = pneg %p227
        $region22: #{tpu_custom_call.1} parent=11 // pred_check_branch
          %299 = sbr.rel (%p297) target = $region24
        $region23: #{tpu_custom_call.1} parent=11 // pred_region
          _
        $region24: #{tpu_custom_call.1} parent=11 // pred_fallthru
          _
        // Predicated region
        $region25: #{tpu_custom_call.1} parent=11 // pred_check
          %p300 = pneg %p248
        $region26: #{tpu_custom_call.1} parent=11 // pred_check_branch
          %302 = sbr.rel (%p300) target = $region28
        $region27: #{tpu_custom_call.1} parent=11 // pred_region
          _
        $region28: #{tpu_custom_call.1} parent=11 // pred_fallthru
          _
      $region12: #{tpu_custom_call.1} parent=5 // pred_fallthru
        _
      %p303 = scmp.lt.s32.totalorder %s18, 2
      // Predicated region
      $region29: #{tpu_custom_call.1} parent=5 // pred_check
        %p304 = pneg %p303
      $region30: #{tpu_custom_call.1} parent=5 // pred_check_branch
        %306 = sbr.rel (%p304) target = $region32
      $region31: #{tpu_custom_call.1} parent=5 // pred_region
        // Predicated region
        $region33: #{tpu_custom_call.1} parent=31 // pred_check
          %p307 = pneg %p52
        $region34: #{tpu_custom_call.1} parent=31 // pred_check_branch
          %309 = sbr.rel (%p307) target = $region36
        $region35: #{tpu_custom_call.1} parent=31 // pred_region
          %p310 = scmp.lt.s32.totalorder %s25, 1
          %s311 = scalar_select %p310, %s25, 1
          %p312 = scmp.lt.s32.totalorder %s26, 0
          %s313 = scalar_select %p312, %s26, 0
          %s314 = sadd.s32 %s313, %s311
          %s315 = smul.addr %s314, 8
          %s316 = scalar_lea.vmem %s0, %s315
        $region36: #{tpu_custom_call.1} parent=31 // pred_fallthru
          _
        // Predicated region
        $region37: #{tpu_custom_call.1} parent=31 // pred_check
          %p317 = pneg %p80
        $region38: #{tpu_custom_call.1} parent=31 // pred_check_branch
          %319 = sbr.rel (%p317) target = $region40
        $region39: #{tpu_custom_call.1} parent=31 // pred_region
          %p320 = scmp.lt.s32.totalorder %s25, 1
          %s321 = scalar_select %p320, %s25, 1
          %p322 = scmp.lt.s32.totalorder %s26, 0
          %s323 = scalar_select %p322, %s26, 0
          %s324 = smul.addr %s321, 4
          %s325 = sadd.s32 %s323, %s324
          %s326 = smul.addr %s325, 8
          %s327 = scalar_lea.vmem %s1, %s326
        $region40: #{tpu_custom_call.1} parent=31 // pred_fallthru
          _
        // Predicated region
        $region41: #{tpu_custom_call.1} parent=31 // pred_check
          %p328 = pneg %p106
        $region42: #{tpu_custom_call.1} parent=31 // pred_check_branch
          %330 = sbr.rel (%p328) target = $region44
        $region43: #{tpu_custom_call.1} parent=31 // pred_region
          %p331 = scmp.lt.s32.totalorder %s25, 1
          %s332 = scalar_select %p331, %s25, 1
          %s333 = smul.addr %s332, 8
          %s334 = smul.addr %s333, 8
          %s335 = scalar_lea.vmem %s2, %s334
        $region44: #{tpu_custom_call.1} parent=31 // pred_fallthru
          _
        // Predicated region
        $region45: #{tpu_custom_call.1} parent=31 // pred_check
          %p336 = pneg %p132
        $region46: #{tpu_custom_call.1} parent=31 // pred_check_branch
          %338 = sbr.rel (%p336) target = $region48
        $region47: #{tpu_custom_call.1} parent=31 // pred_region
          %p339 = scmp.lt.s32.totalorder %s25, 1
          %s340 = scalar_select %p339, %s25, 1
          %s341 = smul.addr %s340, 8
          %s342 = smul.addr %s341, 8
          %s343 = scalar_lea.vmem %s3, %s342
        $region48: #{tpu_custom_call.1} parent=31 // pred_fallthru
          _
        // Predicated region
        $region49: #{tpu_custom_call.1} parent=31 // pred_check
          %p344 = pneg %p158
        $region50: #{tpu_custom_call.1} parent=31 // pred_check_branch
          %346 = sbr.rel (%p344) target = $region52
        $region51: #{tpu_custom_call.1} parent=31 // pred_region
          %p347 = scmp.lt.s32.totalorder %s25, 1
          %s348 = scalar_select %p347, %s25, 1
          %s349 = scalar_lea.vmem %s4, %s348
        $region52: #{tpu_custom_call.1} parent=31 // pred_fallthru
          _
      $region32: #{tpu_custom_call.1} parent=5 // pred_fallthru
        _
      %p350 = scmp.le.s32.totalorder 1, %s18
      %p351 = scmp.lt.s32.totalorder %s18, 3
      %p352 = pnand %p350, %p351
      %p353 = pneg %p352
      // Predicated region
      $region53: #{tpu_custom_call.1} parent=5 // pred_check
        _
      $region54: #{tpu_custom_call.1} parent=5 // pred_check_branch
        %355 = sbr.rel (%p352) target = $region56
      $region55: #{tpu_custom_call.1} parent=5 // pred_region
        %s356 = ssub.s32 %s18, 1
        %p357 = scmp.lt.s32.totalorder %s27, 1
        %s358 = scalar_select %p357, %s27, 1
        %p359 = scmp.lt.s32.totalorder %s28, 0
        %s360 = scalar_select %p359, %s28, 0
        %s361 = sadd.s32 %s360, %s358
        %s362 = smul.addr %s361, 8
        %s363 = scalar_lea.vmem %s0, %s362
        %p364 = pneg %p58
        %p365 = pneg %p55
        %p366 = scmp.lt.s32.totalorder %s27, 1
        %s367 = scalar_select %p366, %s27, 1
        %p368 = scmp.lt.s32.totalorder %s28, 0
        %s369 = scalar_select %p368, %s28, 0
        %s370 = smul.addr %s367, 4
        %s371 = sadd.s32 %s369, %s370
        %s372 = smul.addr %s371, 8
        %s373 = scalar_lea.vmem %s1, %s372
        %p374 = pneg %p86
        %p375 = pneg %p83
        %p376 = scmp.lt.s32.totalorder %s27, 1
        %s377 = scalar_select %p376, %s27, 1
        %s378 = smul.addr %s377, 8
        %s379 = smul.addr %s378, 8
        %s380 = scalar_lea.vmem %s2, %s379
        %p381 = pneg %p112
        %p382 = pneg %p109
        %p383 = scmp.lt.s32.totalorder %s27, 1
        %s384 = scalar_select %p383, %s27, 1
        %s385 = smul.addr %s384, 8
        %s386 = smul.addr %s385, 8
        %s387 = scalar_lea.vmem %s3, %s386
        %p388 = pneg %p138
        %p389 = pneg %p135
        %p390 = scmp.lt.s32.totalorder %s27, 1
        %s391 = scalar_select %p390, %s27, 1
        %s392 = scalar_lea.vmem %s4, %s391
        %p393 = pneg %p164
        %p394 = pneg %p161
        %p395 = pneg %p185
        %p396 = pneg %p182
        %p397 = pneg %p206
        %p398 = pneg %p203
        %p399 = pneg %p227
        %p400 = pneg %p224
        %p401 = pneg %p248
        %p402 = pneg %p245
        %p403 = pneg %p276
        %p404 = pneg %p273
        %s405 = sand.u32 %s263, 1
        %s406 = scalar_lea.sflag [#allocation3], %s405
        %s407 = sand.u32 %s263, 1
        %s408 = smul.addr %s407, 8
        %s409 = scalar_lea.vmem [#allocation2], %s408
        %p410 = scmp.lt.s32.totalorder %s27, 1
        %s411 = scalar_select %p410, %s27, 1
        %p412 = scmp.lt.s32.totalorder %s28, 0
        %s413 = scalar_select %p412, %s28, 0
        %s414 = sadd.s32 %s413, %s411
        %s415 = smul.addr %s414, 8
        %s416 = scalar_lea.vmem %s0, %s415
        %p417 = scmp.lt.s32.totalorder %s27, 1
        %s418 = scalar_select %p417, %s27, 1
        %p419 = scmp.lt.s32.totalorder %s28, 0
        %s420 = scalar_select %p419, %s28, 0
        %s421 = smul.addr %s418, 4
        %s422 = sadd.s32 %s420, %s421
        %s423 = smul.addr %s422, 8
        %s424 = scalar_lea.vmem %s1, %s423
        %p425 = scmp.lt.s32.totalorder %s27, 1
        %s426 = scalar_select %p425, %s27, 1
        %s427 = smul.addr %s426, 8
        %s428 = smul.addr %s427, 8
        %s429 = scalar_lea.vmem %s2, %s428
        %p430 = scmp.lt.s32.totalorder %s27, 1
        %s431 = scalar_select %p430, %s27, 1
        %s432 = smul.addr %s431, 8
        %s433 = smul.addr %s432, 8
        %s434 = scalar_lea.vmem %s3, %s433
        %p435 = scmp.lt.s32.totalorder %s27, 1
        %s436 = scalar_select %p435, %s27, 1
        %s437 = scalar_lea.vmem %s4, %s436
        %v438 = vld [vmem:[%s416] sm:$0xff]
        %v439 = vld [vmem:[%s424] sm:$0xff]
        %v440 = vld [vmem:[%s424 + $0x8] sm:$0xff]
        %v441 = vld [vmem:[%s424 + $0x10] sm:$0xff]
        %v442 = vld [vmem:[%s424 + $0x18] sm:$0xff]
        %v443 = vld [vmem:[%s429] sm:$0xff]
        %v444 = vld [vmem:[%s429 + $0x8] sm:$0xff]
        %v445 = vld [vmem:[%s429 + $0x10] sm:$0xff]
        %v446 = vld [vmem:[%s429 + $0x18] sm:$0xff]
        %v447 = vld [vmem:[%s429 + $0x20] sm:$0xff]
        %v448 = vld [vmem:[%s429 + $0x28] sm:$0xff]
        %v449 = vld [vmem:[%s429 + $0x30] sm:$0xff]
        %v450 = vld [vmem:[%s429 + $0x38] sm:$0xff]
        %v451 = vld [vmem:[%s434] sm:$0xff]
        %v452 = vld [vmem:[%s434 + $0x8] sm:$0xff]
        %v453 = vld [vmem:[%s434 + $0x10] sm:$0xff]
        %v454 = vld [vmem:[%s434 + $0x18] sm:$0xff]
        %v455 = vld [vmem:[%s434 + $0x20] sm:$0xff]
        %v456 = vld [vmem:[%s434 + $0x28] sm:$0xff]
        %v457 = vld [vmem:[%s434 + $0x30] sm:$0xff]
        %v458 = vld [vmem:[%s434 + $0x38] sm:$0xff]
        %v459 = vld [vmem:[%s437] sm:$0x1]
        %v461 = vlaneseq
        %v462 = vshrl.u32 %v461, 7
        %v463 = vsub.s32 0, %v462
        %v464 = vrot.slane %v459, %v463
        %vm466 = vcmask 64512
        %v468 = vsel %vm466, %v439, 0
        %v471 = vsel %vm466, %v443, 0
        %v474 = vsel %vm466, %v444, 0
        %476 = vmatprep.subr.mxu0 0.0
        %477 = vmatpush1.xpose.msra.mxu0 %v471
        %478 = vmatprep.subr.mxu0 0.0
        %479 = vmatpush1.xpose.msra.mxu0 %v474
        %480 = vmatprep.subr.mxu0 0.0
        %481 = vmatpush1.xpose.msra.mxu0 0.0
        %482 = vmatprep.subr.mxu0 0.0
        %483 = vmatpush1.xpose.msra.mxu0 0.0
        %484 = vmatprep.subr.mxu0 0.0
        %485 = vmatpush1.xpose.msra.mxu0 0.0
        %486 = vmatprep.subr.mxu0 0.0
        %487 = vmatpush1.xpose.msra.mxu0 0.0
        %488 = vmatprep.subr.mxu0 0.0
        %489 = vmatpush1.xpose.msra.mxu0 0.0
        %490 = vmatprep.subr.mxu0 0.0
        %491 = vmatpush1.xpose.msra.mxu0 0.0
        %492 = vmatprep.subr.mxu0 0.0
        %493 = vmatpush1.xpose.msra.mxu0 0.0
        %494 = vmatprep.subr.mxu0 0.0
        %495 = vmatpush1.xpose.msra.mxu0 0.0
        %496 = vmatprep.subr.mxu0 0.0
        %497 = vmatpush1.xpose.msra.mxu0 0.0
        %498 = vmatprep.subr.mxu0 0.0
        %499 = vmatpush1.xpose.msra.mxu0 0.0
        %500 = vmatprep.subr.mxu0 0.0
        %501 = vmatpush1.xpose.msra.mxu0 0.0
        %502 = vmatprep.subr.mxu0 0.0
        %503 = vmatpush1.xpose.msra.mxu0 0.0
        %504 = vmatprep.subr.mxu0 0.0
        %505 = vmatpush1.xpose.msra.mxu0 0.0
        %506 = vmatprep.subr.mxu0 0.0
        %507 = vmatpush1.xpose.msra.mxu0 0.0
        %508 = vmatprep.subr.mxu0 0.0
        %509 = vmatpush1.xpose.msra.mxu0 0.0
        %510 = vmatprep.subr.mxu0 0.0
        %511 = vmatpush1.xpose.msra.mxu0 0.0
        %512 = vmatprep.subr.mxu0 0.0
        %513 = vmatpush1.xpose.msra.mxu0 0.0
        %514 = vmatprep.subr.mxu0 0.0
        %515 = vmatpush1.xpose.msra.mxu0 0.0
        %516 = vmatprep.subr.mxu0 0.0
        %517 = vmatpush1.xpose.msra.mxu0 0.0
        %518 = vmatprep.subr.mxu0 0.0
        %519 = vmatpush1.xpose.msra.mxu0 0.0
        %520 = vmatprep.subr.mxu0 0.0
        %521 = vmatpush1.xpose.msra.mxu0 0.0
        %522 = vmatprep.subr.mxu0 0.0
        %523 = vmatpush1.xpose.msra.mxu0 0.0
        %524 = vmatprep.subr.mxu0 0.0
        %525 = vmatpush1.xpose.msra.mxu0 0.0
        %526 = vmatprep.subr.mxu0 0.0
        %527 = vmatpush1.xpose.msra.mxu0 0.0
        %528 = vmatprep.subr.mxu0 0.0
        %529 = vmatpush1.xpose.msra.mxu0 0.0
        %530 = vmatprep.subr.mxu0 0.0
        %531 = vmatpush1.xpose.msra.mxu0 0.0
        %532 = vmatprep.subr.mxu0 0.0
        %533 = vmatpush1.xpose.msra.mxu0 0.0
        %534 = vmatprep.subr.mxu0 0.0
        %535 = vmatpush1.xpose.msra.mxu0 0.0
        %536 = vmatprep.subr.mxu0 0.0
        %537 = vmatpush1.xpose.msra.mxu0 0.0
        %538 = vmatprep.subr.mxu0 0.0
        %539 = vmatpush1.xpose.msra.mxu0 0.0
        %540 = vmatprep.mubr.f32.mxu0 0.0
        %541 = vmatmul.mubr.f32.gmra.mrb[0].mxu0 %v468
        %v542 = vpop.f32.mrb[0].mxu0
        %v543 = vadd.f32 %v464, %v542
        %v544 = vpop.f32.mrb[0].mxu0
        %545 = vdwg.mxu0
        %v547 = vsel %vm466, %v440, 0
        %v550 = vsel %vm466, %v445, 0
        %v553 = vsel %vm466, %v446, 0
        %555 = vmatprep.subr.mxu0 0.0
        %556 = vmatpush1.xpose.msra.mxu0 %v550
        %557 = vmatprep.subr.mxu0 0.0
        %558 = vmatpush1.xpose.msra.mxu0 %v553
        %559 = vmatprep.subr.mxu0 0.0
        %560 = vmatpush1.xpose.msra.mxu0 0.0
        %561 = vmatprep.subr.mxu0 0.0
        %562 = vmatpush1.xpose.msra.mxu0 0.0
        %563 = vmatprep.subr.mxu0 0.0
        %564 = vmatpush1.xpose.msra.mxu0 0.0
        %565 = vmatprep.subr.mxu0 0.0
        %566 = vmatpush1.xpose.msra.mxu0 0.0
        %567 = vmatprep.subr.mxu0 0.0
        %568 = vmatpush1.xpose.msra.mxu0 0.0
        %569 = vmatprep.subr.mxu0 0.0
        %570 = vmatpush1.xpose.msra.mxu0 0.0
        %571 = vmatprep.subr.mxu0 0.0
        %572 = vmatpush1.xpose.msra.mxu0 0.0
        %573 = vmatprep.subr.mxu0 0.0
        %574 = vmatpush1.xpose.msra.mxu0 0.0
        %575 = vmatprep.subr.mxu0 0.0
        %576 = vmatpush1.xpose.msra.mxu0 0.0
        %577 = vmatprep.subr.mxu0 0.0
        %578 = vmatpush1.xpose.msra.mxu0 0.0
        %579 = vmatprep.subr.mxu0 0.0
        %580 = vmatpush1.xpose.msra.mxu0 0.0
        %581 = vmatprep.subr.mxu0 0.0
        %582 = vmatpush1.xpose.msra.mxu0 0.0
        %583 = vmatprep.subr.mxu0 0.0
        %584 = vmatpush1.xpose.msra.mxu0 0.0
        %585 = vmatprep.subr.mxu0 0.0
        %586 = vmatpush1.xpose.msra.mxu0 0.0
        %587 = vmatprep.subr.mxu0 0.0
        %588 = vmatpush1.xpose.msra.mxu0 0.0
        %589 = vmatprep.subr.mxu0 0.0
        %590 = vmatpush1.xpose.msra.mxu0 0.0
        %591 = vmatprep.subr.mxu0 0.0
        %592 = vmatpush1.xpose.msra.mxu0 0.0
        %593 = vmatprep.subr.mxu0 0.0
        %594 = vmatpush1.xpose.msra.mxu0 0.0
        %595 = vmatprep.subr.mxu0 0.0
        %596 = vmatpush1.xpose.msra.mxu0 0.0
        %597 = vmatprep.subr.mxu0 0.0
        %598 = vmatpush1.xpose.msra.mxu0 0.0
        %599 = vmatprep.subr.mxu0 0.0
        %600 = vmatpush1.xpose.msra.mxu0 0.0
        %601 = vmatprep.subr.mxu0 0.0
        %602 = vmatpush1.xpose.msra.mxu0 0.0
        %603 = vmatprep.subr.mxu0 0.0
        %604 = vmatpush1.xpose.msra.mxu0 0.0
        %605 = vmatprep.subr.mxu0 0.0
        %606 = vmatpush1.xpose.msra.mxu0 0.0
        %607 = vmatprep.subr.mxu0 0.0
        %608 = vmatpush1.xpose.msra.mxu0 0.0
        %609 = vmatprep.subr.mxu0 0.0
        %610 = vmatpush1.xpose.msra.mxu0 0.0
        %611 = vmatprep.subr.mxu0 0.0
        %612 = vmatpush1.xpose.msra.mxu0 0.0
        %613 = vmatprep.subr.mxu0 0.0
        %614 = vmatpush1.xpose.msra.mxu0 0.0
        %615 = vmatprep.subr.mxu0 0.0
        %616 = vmatpush1.xpose.msra.mxu0 0.0
        %617 = vmatprep.subr.mxu0 0.0
        %618 = vmatpush1.xpose.msra.mxu0 0.0
        %619 = vmatprep.mubr.f32.mxu0 0.0
        %620 = vmatmul.mubr.f32.gmra.mrb[0].mxu0 %v547
        %v621 = vpop.f32.mrb[0].mxu0
        %v622 = vadd.f32 %v464, %v621
        %v623 = vpop.f32.mrb[0].mxu0
        %624 = vdwg.mxu0
        %v626 = vsel %vm466, %v441, 0
        %v629 = vsel %vm466, %v447, 0
        %v632 = vsel %vm466, %v448, 0
        %634 = vmatprep.subr.mxu0 0.0
        %635 = vmatpush1.xpose.msra.mxu0 %v629
        %636 = vmatprep.subr.mxu0 0.0
        %637 = vmatpush1.xpose.msra.mxu0 %v632
        %638 = vmatprep.subr.mxu0 0.0
        %639 = vmatpush1.xpose.msra.mxu0 0.0
        %640 = vmatprep.subr.mxu0 0.0
        %641 = vmatpush1.xpose.msra.mxu0 0.0
        %642 = vmatprep.subr.mxu0 0.0
        %643 = vmatpush1.xpose.msra.mxu0 0.0
        %644 = vmatprep.subr.mxu0 0.0
        %645 = vmatpush1.xpose.msra.mxu0 0.0
        %646 = vmatprep.subr.mxu0 0.0
        %647 = vmatpush1.xpose.msra.mxu0 0.0
        %648 = vmatprep.subr.mxu0 0.0
        %649 = vmatpush1.xpose.msra.mxu0 0.0
        %650 = vmatprep.subr.mxu0 0.0
        %651 = vmatpush1.xpose.msra.mxu0 0.0
        %652 = vmatprep.subr.mxu0 0.0
        %653 = vmatpush1.xpose.msra.mxu0 0.0
        %654 = vmatprep.subr.mxu0 0.0
        %655 = vmatpush1.xpose.msra.mxu0 0.0
        %656 = vmatprep.subr.mxu0 0.0
        %657 = vmatpush1.xpose.msra.mxu0 0.0
        %658 = vmatprep.subr.mxu0 0.0
        %659 = vmatpush1.xpose.msra.mxu0 0.0
        %660 = vmatprep.subr.mxu0 0.0
        %661 = vmatpush1.xpose.msra.mxu0 0.0
        %662 = vmatprep.subr.mxu0 0.0
        %663 = vmatpush1.xpose.msra.mxu0 0.0
        %664 = vmatprep.subr.mxu0 0.0
        %665 = vmatpush1.xpose.msra.mxu0 0.0
        %666 = vmatprep.subr.mxu0 0.0
        %667 = vmatpush1.xpose.msra.mxu0 0.0
        %668 = vmatprep.subr.mxu0 0.0
        %669 = vmatpush1.xpose.msra.mxu0 0.0
        %670 = vmatprep.subr.mxu0 0.0
        %671 = vmatpush1.xpose.msra.mxu0 0.0
        %672 = vmatprep.subr.mxu0 0.0
        %673 = vmatpush1.xpose.msra.mxu0 0.0
        %674 = vmatprep.subr.mxu0 0.0
        %675 = vmatpush1.xpose.msra.mxu0 0.0
        %676 = vmatprep.subr.mxu0 0.0
        %677 = vmatpush1.xpose.msra.mxu0 0.0
        %678 = vmatprep.subr.mxu0 0.0
        %679 = vmatpush1.xpose.msra.mxu0 0.0
        %680 = vmatprep.subr.mxu0 0.0
        %681 = vmatpush1.xpose.msra.mxu0 0.0
        %682 = vmatprep.subr.mxu0 0.0
        %683 = vmatpush1.xpose.msra.mxu0 0.0
        %684 = vmatprep.subr.mxu0 0.0
        %685 = vmatpush1.xpose.msra.mxu0 0.0
        %686 = vmatprep.subr.mxu0 0.0
        %687 = vmatpush1.xpose.msra.mxu0 0.0
        %688 = vmatprep.subr.mxu0 0.0
        %689 = vmatpush1.xpose.msra.mxu0 0.0
        %690 = vmatprep.subr.mxu0 0.0
        %691 = vmatpush1.xpose.msra.mxu0 0.0
        %692 = vmatprep.subr.mxu0 0.0
        %693 = vmatpush1.xpose.msra.mxu0 0.0
        %694 = vmatprep.subr.mxu0 0.0
        %695 = vmatpush1.xpose.msra.mxu0 0.0
        %696 = vmatprep.subr.mxu0 0.0
        %697 = vmatpush1.xpose.msra.mxu0 0.0
        %698 = vmatprep.mubr.f32.mxu0 0.0
        %699 = vmatmul.mubr.f32.gmra.mrb[0].mxu0 %v626
        %v700 = vpop.f32.mrb[0].mxu0
        %v701 = vadd.f32 %v464, %v700
        %v702 = vpop.f32.mrb[0].mxu0
        %703 = vdwg.mxu0
        %v705 = vsel %vm466, %v442, 0
        %v708 = vsel %vm466, %v449, 0
        %v711 = vsel %vm466, %v450, 0
        %713 = vmatprep.subr.mxu0 0.0
        %714 = vmatpush1.xpose.msra.mxu0 %v708
        %715 = vmatprep.subr.mxu0 0.0
        %716 = vmatpush1.xpose.msra.mxu0 %v711
        %717 = vmatprep.subr.mxu0 0.0
        %718 = vmatpush1.xpose.msra.mxu0 0.0
        %719 = vmatprep.subr.mxu0 0.0
        %720 = vmatpush1.xpose.msra.mxu0 0.0
        %721 = vmatprep.subr.mxu0 0.0
        %722 = vmatpush1.xpose.msra.mxu0 0.0
        %723 = vmatprep.subr.mxu0 0.0
        %724 = vmatpush1.xpose.msra.mxu0 0.0
        %725 = vmatprep.subr.mxu0 0.0
        %726 = vmatpush1.xpose.msra.mxu0 0.0
        %727 = vmatprep.subr.mxu0 0.0
        %728 = vmatpush1.xpose.msra.mxu0 0.0
        %729 = vmatprep.subr.mxu0 0.0
        %730 = vmatpush1.xpose.msra.mxu0 0.0
        %731 = vmatprep.subr.mxu0 0.0
        %732 = vmatpush1.xpose.msra.mxu0 0.0
        %733 = vmatprep.subr.mxu0 0.0
        %734 = vmatpush1.xpose.msra.mxu0 0.0
        %735 = vmatprep.subr.mxu0 0.0
        %736 = vmatpush1.xpose.msra.mxu0 0.0
        %737 = vmatprep.subr.mxu0 0.0
        %738 = vmatpush1.xpose.msra.mxu0 0.0
        %739 = vmatprep.subr.mxu0 0.0
        %740 = vmatpush1.xpose.msra.mxu0 0.0
        %741 = vmatprep.subr.mxu0 0.0
        %742 = vmatpush1.xpose.msra.mxu0 0.0
        %743 = vmatprep.subr.mxu0 0.0
        %744 = vmatpush1.xpose.msra.mxu0 0.0
        %745 = vmatprep.subr.mxu0 0.0
        %746 = vmatpush1.xpose.msra.mxu0 0.0
        %747 = vmatprep.subr.mxu0 0.0
        %748 = vmatpush1.xpose.msra.mxu0 0.0
        %749 = vmatprep.subr.mxu0 0.0
        %750 = vmatpush1.xpose.msra.mxu0 0.0
        %751 = vmatprep.subr.mxu0 0.0
        %752 = vmatpush1.xpose.msra.mxu0 0.0
        %753 = vmatprep.subr.mxu0 0.0
        %754 = vmatpush1.xpose.msra.mxu0 0.0
        %755 = vmatprep.subr.mxu0 0.0
        %756 = vmatpush1.xpose.msra.mxu0 0.0
        %757 = vmatprep.subr.mxu0 0.0
        %758 = vmatpush1.xpose.msra.mxu0 0.0
        %759 = vmatprep.subr.mxu0 0.0
        %760 = vmatpush1.xpose.msra.mxu0 0.0
        %761 = vmatprep.subr.mxu0 0.0
        %762 = vmatpush1.xpose.msra.mxu0 0.0
        %763 = vmatprep.subr.mxu0 0.0
        %764 = vmatpush1.xpose.msra.mxu0 0.0
        %765 = vmatprep.subr.mxu0 0.0
        %766 = vmatpush1.xpose.msra.mxu0 0.0
        %767 = vmatprep.subr.mxu0 0.0
        %768 = vmatpush1.xpose.msra.mxu0 0.0
        %769 = vmatprep.subr.mxu0 0.0
        %770 = vmatpush1.xpose.msra.mxu0 0.0
        %771 = vmatprep.subr.mxu0 0.0
        %772 = vmatpush1.xpose.msra.mxu0 0.0
        %773 = vmatprep.subr.mxu0 0.0
        %774 = vmatpush1.xpose.msra.mxu0 0.0
        %775 = vmatprep.subr.mxu0 0.0
        %776 = vmatpush1.xpose.msra.mxu0 0.0
        %777 = vmatprep.mubr.f32.mxu0 0.0
        %778 = vmatmul.mubr.f32.gmra.mrb[0].mxu0 %v705
        %v779 = vpop.f32.mrb[0].mxu0
        %v780 = vadd.f32 %v464, %v779
        %v781 = vpop.f32.mrb[0].mxu0
        %782 = vdwg.mxu0
        %vm783 = vcmask 130048
        %v784 = vsel %vm783, %v543, -inf
        %785 = vmax.xlane.f32.xlu0 %v784
        %v786 = vpop.xlane.xlu0 %785
        %v787 = vsel %vm783, %v622, -inf
        %788 = vmax.xlane.f32.xlu0 %v787
        %v789 = vpop.xlane.xlu0 %788
        %v790 = vsel %vm783, %v701, -inf
        %791 = vmax.xlane.f32.xlu0 %v790
        %v792 = vpop.xlane.xlu0 %791
        %v793 = vsel %vm783, %v780, -inf
        %794 = vmax.xlane.f32.xlu0 %v793
        %v795 = vpop.xlane.xlu0 %794
        %v796 = vsub.f32 %v543, %v786
        %v797 = vsub.f32 %v622, %v789
        %v798 = vsub.f32 %v701, %v792
        %v799 = vsub.f32 %v780, %v795
        %v800 = vmul.f32 %v796, 1.442695
        %v801 = vpow.pop %v800
        %v802 = vmul.f32 %v797, 1.442695
        %v803 = vpow.pop %v802
        %v804 = vmul.f32 %v798, 1.442695
        %v805 = vpow.pop %v804
        %v806 = vmul.f32 %v799, 1.442695
        %v807 = vpow.pop %v806
        %v808 = vsel %vm783, %v801, 0.0
        %809 = vadd.xlane.f32.xlu0 %v808
        %v810 = vpop.xlane.xlu0 %809
        %v811 = vsel %vm783, %v803, 0.0
        %812 = vadd.xlane.f32.xlu0 %v811
        %v813 = vpop.xlane.xlu0 %812
        %v814 = vsel %vm783, %v805, 0.0
        %815 = vadd.xlane.f32.xlu0 %v814
        %v816 = vpop.xlane.xlu0 %815
        %v817 = vsel %vm783, %v807, 0.0
        %818 = vadd.xlane.f32.xlu0 %v817
        %v819 = vpop.xlane.xlu0 %818
        %v820 = vrcp.pop %v810
        %v821 = vmul.f32 %v801, %v820
        %v822 = vrcp.pop %v813
        %v823 = vmul.f32 %v803, %v822
        %v824 = vrcp.pop %v816
        %v825 = vmul.f32 %v805, %v824
        %v826 = vrcp.pop %v819
        %v827 = vmul.f32 %v807, %v826
        %v829 = vsel %vm783, %v821, 0
        %831 = vmatprep.subr.mxu0 0.0
        %832 = vmatpush1.msra.mxu0 %v451
        %833 = vmatprep.subr.mxu0 0.0
        %834 = vmatpush1.msra.mxu0 %v452
        %835 = vmatprep.subr.mxu0 0.0
        %836 = vmatpush1.msra.mxu0 0.0
        %837 = vmatprep.subr.mxu0 0.0
        %838 = vmatpush1.msra.mxu0 0.0
        %839 = vmatprep.subr.mxu0 0.0
        %840 = vmatpush1.msra.mxu0 0.0
        %841 = vmatprep.subr.mxu0 0.0
        %842 = vmatpush1.msra.mxu0 0.0
        %843 = vmatprep.subr.mxu0 0.0
        %844 = vmatpush1.msra.mxu0 0.0
        %845 = vmatprep.subr.mxu0 0.0
        %846 = vmatpush1.msra.mxu0 0.0
        %847 = vmatprep.subr.mxu0 0.0
        %848 = vmatpush1.msra.mxu0 0.0
        %849 = vmatprep.subr.mxu0 0.0
        %850 = vmatpush1.msra.mxu0 0.0
        %851 = vmatprep.subr.mxu0 0.0
        %852 = vmatpush1.msra.mxu0 0.0
        %853 = vmatprep.subr.mxu0 0.0
        %854 = vmatpush1.msra.mxu0 0.0
        %855 = vmatprep.subr.mxu0 0.0
        %856 = vmatpush1.msra.mxu0 0.0
        %857 = vmatprep.subr.mxu0 0.0
        %858 = vmatpush1.msra.mxu0 0.0
        %859 = vmatprep.subr.mxu0 0.0
        %860 = vmatpush1.msra.mxu0 0.0
        %861 = vmatprep.subr.mxu0 0.0
        %862 = vmatpush1.msra.mxu0 0.0
        %863 = vmatprep.subr.mxu0 0.0
        %864 = vmatpush1.msra.mxu0 0.0
        %865 = vmatprep.subr.mxu0 0.0
        %866 = vmatpush1.msra.mxu0 0.0
        %867 = vmatprep.subr.mxu0 0.0
        %868 = vmatpush1.msra.mxu0 0.0
        %869 = vmatprep.subr.mxu0 0.0
        %870 = vmatpush1.msra.mxu0 0.0
        %871 = vmatprep.subr.mxu0 0.0
        %872 = vmatpush1.msra.mxu0 0.0
        %873 = vmatprep.subr.mxu0 0.0
        %874 = vmatpush1.msra.mxu0 0.0
        %875 = vmatprep.subr.mxu0 0.0
        %876 = vmatpush1.msra.mxu0 0.0
        %877 = vmatprep.subr.mxu0 0.0
        %878 = vmatpush1.msra.mxu0 0.0
        %879 = vmatprep.subr.mxu0 0.0
        %880 = vmatpush1.msra.mxu0 0.0
        %881 = vmatprep.subr.mxu0 0.0
        %882 = vmatpush1.msra.mxu0 0.0
        %883 = vmatprep.subr.mxu0 0.0
        %884 = vmatpush1.msra.mxu0 0.0
        %885 = vmatprep.subr.mxu0 0.0
        %886 = vmatpush1.msra.mxu0 0.0
        %887 = vmatprep.subr.mxu0 0.0
        %888 = vmatpush1.msra.mxu0 0.0
        %889 = vmatprep.subr.mxu0 0.0
        %890 = vmatpush1.msra.mxu0 0.0
        %891 = vmatprep.subr.mxu0 0.0
        %892 = vmatpush1.msra.mxu0 0.0
        %893 = vmatprep.subr.mxu0 0.0
        %894 = vmatpush1.msra.mxu0 0.0
        %895 = vmatprep.mubr.f32.mxu0 0.0
        %896 = vmatmul.mubr.f32.gmra.mrb[0].mxu0 %v829
        %v897 = vpop.f32.mrb[0].mxu0
        %v898 = vadd.f32 0.0, %v897
        %v899 = vpop.f32.mrb[0].mxu0
        %900 = vdwg.mxu0
        %v902 = vsel %vm783, %v823, 0
        %904 = vmatprep.subr.mxu0 0.0
        %905 = vmatpush1.msra.mxu0 %v453
        %906 = vmatprep.subr.mxu0 0.0
        %907 = vmatpush1.msra.mxu0 %v454
        %908 = vmatprep.subr.mxu0 0.0
        %909 = vmatpush1.msra.mxu0 0.0
        %910 = vmatprep.subr.mxu0 0.0
        %911 = vmatpush1.msra.mxu0 0.0
        %912 = vmatprep.subr.mxu0 0.0
        %913 = vmatpush1.msra.mxu0 0.0
        %914 = vmatprep.subr.mxu0 0.0
        %915 = vmatpush1.msra.mxu0 0.0
        %916 = vmatprep.subr.mxu0 0.0
        %917 = vmatpush1.msra.mxu0 0.0
        %918 = vmatprep.subr.mxu0 0.0
        %919 = vmatpush1.msra.mxu0 0.0
        %920 = vmatprep.subr.mxu0 0.0
        %921 = vmatpush1.msra.mxu0 0.0
        %922 = vmatprep.subr.mxu0 0.0
        %923 = vmatpush1.msra.mxu0 0.0
        %924 = vmatprep.subr.mxu0 0.0
        %925 = vmatpush1.msra.mxu0 0.0
        %926 = vmatprep.subr.mxu0 0.0
        %927 = vmatpush1.msra.mxu0 0.0
        %928 = vmatprep.subr.mxu0 0.0
        %929 = vmatpush1.msra.mxu0 0.0
        %930 = vmatprep.subr.mxu0 0.0
        %931 = vmatpush1.msra.mxu0 0.0
        %932 = vmatprep.subr.mxu0 0.0
        %933 = vmatpush1.msra.mxu0 0.0
        %934 = vmatprep.subr.mxu0 0.0
        %935 = vmatpush1.msra.mxu0 0.0
        %936 = vmatprep.subr.mxu0 0.0
        %937 = vmatpush1.msra.mxu0 0.0
        %938 = vmatprep.subr.mxu0 0.0
        %939 = vmatpush1.msra.mxu0 0.0
        %940 = vmatprep.subr.mxu0 0.0
        %941 = vmatpush1.msra.mxu0 0.0
        %942 = vmatprep.subr.mxu0 0.0
        %943 = vmatpush1.msra.mxu0 0.0
        %944 = vmatprep.subr.mxu0 0.0
        %945 = vmatpush1.msra.mxu0 0.0
        %946 = vmatprep.subr.mxu0 0.0
        %947 = vmatpush1.msra.mxu0 0.0
        %948 = vmatprep.subr.mxu0 0.0
        %949 = vmatpush1.msra.mxu0 0.0
        %950 = vmatprep.subr.mxu0 0.0
        %951 = vmatpush1.msra.mxu0 0.0
        %952 = vmatprep.subr.mxu0 0.0
        %953 = vmatpush1.msra.mxu0 0.0
        %954 = vmatprep.subr.mxu0 0.0
        %955 = vmatpush1.msra.mxu0 0.0
        %956 = vmatprep.subr.mxu0 0.0
        %957 = vmatpush1.msra.mxu0 0.0
        %958 = vmatprep.subr.mxu0 0.0
        %959 = vmatpush1.msra.mxu0 0.0
        %960 = vmatprep.subr.mxu0 0.0
        %961 = vmatpush1.msra.mxu0 0.0
        %962 = vmatprep.subr.mxu0 0.0
        %963 = vmatpush1.msra.mxu0 0.0
        %964 = vmatprep.subr.mxu0 0.0
        %965 = vmatpush1.msra.mxu0 0.0
        %966 = vmatprep.subr.mxu0 0.0
        %967 = vmatpush1.msra.mxu0 0.0
        %968 = vmatprep.mubr.f32.mxu0 0.0
        %969 = vmatmul.mubr.f32.gmra.mrb[0].mxu0 %v902
        %v970 = vpop.f32.mrb[0].mxu0
        %v971 = vadd.f32 0.0, %v970
        %v972 = vpop.f32.mrb[0].mxu0
        %973 = vdwg.mxu0
        %v975 = vsel %vm783, %v825, 0
        %977 = vmatprep.subr.mxu0 0.0
        %978 = vmatpush1.msra.mxu0 %v455
        %979 = vmatprep.subr.mxu0 0.0
        %980 = vmatpush1.msra.mxu0 %v456
        %981 = vmatprep.subr.mxu0 0.0
        %982 = vmatpush1.msra.mxu0 0.0
        %983 = vmatprep.subr.mxu0 0.0
        %984 = vmatpush1.msra.mxu0 0.0
        %985 = vmatprep.subr.mxu0 0.0
        %986 = vmatpush1.msra.mxu0 0.0
        %987 = vmatprep.subr.mxu0 0.0
        %988 = vmatpush1.msra.mxu0 0.0
        %989 = vmatprep.subr.mxu0 0.0
        %990 = vmatpush1.msra.mxu0 0.0
        %991 = vmatprep.subr.mxu0 0.0
        %992 = vmatpush1.msra.mxu0 0.0
        %993 = vmatprep.subr.mxu0 0.0
        %994 = vmatpush1.msra.mxu0 0.0
        %995 = vmatprep.subr.mxu0 0.0
        %996 = vmatpush1.msra.mxu0 0.0
        %997 = vmatprep.subr.mxu0 0.0
        %998 = vmatpush1.msra.mxu0 0.0
        %999 = vmatprep.subr.mxu0 0.0
        %1000 = vmatpush1.msra.mxu0 0.0
        %1001 = vmatprep.subr.mxu0 0.0
        %1002 = vmatpush1.msra.mxu0 0.0
        %1003 = vmatprep.subr.mxu0 0.0
        %1004 = vmatpush1.msra.mxu0 0.0
        %1005 = vmatprep.subr.mxu0 0.0
        %1006 = vmatpush1.msra.mxu0 0.0
        %1007 = vmatprep.subr.mxu0 0.0
        %1008 = vmatpush1.msra.mxu0 0.0
        %1009 = vmatprep.subr.mxu0 0.0
        %1010 = vmatpush1.msra.mxu0 0.0
        %1011 = vmatprep.subr.mxu0 0.0
        %1012 = vmatpush1.msra.mxu0 0.0
        %1013 = vmatprep.subr.mxu0 0.0
        %1014 = vmatpush1.msra.mxu0 0.0
        %1015 = vmatprep.subr.mxu0 0.0
        %1016 = vmatpush1.msra.mxu0 0.0
        %1017 = vmatprep.subr.mxu0 0.0
        %1018 = vmatpush1.msra.mxu0 0.0
        %1019 = vmatprep.subr.mxu0 0.0
        %1020 = vmatpush1.msra.mxu0 0.0
        %1021 = vmatprep.subr.mxu0 0.0
        %1022 = vmatpush1.msra.mxu0 0.0
        %1023 = vmatprep.subr.mxu0 0.0
        %1024 = vmatpush1.msra.mxu0 0.0
        %1025 = vmatprep.subr.mxu0 0.0
        %1026 = vmatpush1.msra.mxu0 0.0
        %1027 = vmatprep.subr.mxu0 0.0
        %1028 = vmatpush1.msra.mxu0 0.0
        %1029 = vmatprep.subr.mxu0 0.0
        %1030 = vmatpush1.msra.mxu0 0.0
        %1031 = vmatprep.subr.mxu0 0.0
        %1032 = vmatpush1.msra.mxu0 0.0
        %1033 = vmatprep.subr.mxu0 0.0
        %1034 = vmatpush1.msra.mxu0 0.0
        %1035 = vmatprep.subr.mxu0 0.0
        %1036 = vmatpush1.msra.mxu0 0.0
        %1037 = vmatprep.subr.mxu0 0.0
        %1038 = vmatpush1.msra.mxu0 0.0
        %1039 = vmatprep.subr.mxu0 0.0
        %1040 = vmatpush1.msra.mxu0 0.0
        %1041 = vmatprep.mubr.f32.mxu0 0.0
        %1042 = vmatmul.mubr.f32.gmra.mrb[0].mxu0 %v975
        %v1043 = vpop.f32.mrb[0].mxu0
        %v1044 = vadd.f32 0.0, %v1043
        %v1045 = vpop.f32.mrb[0].mxu0
        %1046 = vdwg.mxu0
        %v1048 = vsel %vm783, %v827, 0
        %1050 = vmatprep.subr.mxu0 0.0
        %1051 = vmatpush1.msra.mxu0 %v457
        %1052 = vmatprep.subr.mxu0 0.0
        %1053 = vmatpush1.msra.mxu0 %v458
        %1054 = vmatprep.subr.mxu0 0.0
        %1055 = vmatpush1.msra.mxu0 0.0
        %1056 = vmatprep.subr.mxu0 0.0
        %1057 = vmatpush1.msra.mxu0 0.0
        %1058 = vmatprep.subr.mxu0 0.0
        %1059 = vmatpush1.msra.mxu0 0.0
        %1060 = vmatprep.subr.mxu0 0.0
        %1061 = vmatpush1.msra.mxu0 0.0
        %1062 = vmatprep.subr.mxu0 0.0
        %1063 = vmatpush1.msra.mxu0 0.0
        %1064 = vmatprep.subr.mxu0 0.0
        %1065 = vmatpush1.msra.mxu0 0.0
        %1066 = vmatprep.subr.mxu0 0.0
        %1067 = vmatpush1.msra.mxu0 0.0
        %1068 = vmatprep.subr.mxu0 0.0
        %1069 = vmatpush1.msra.mxu0 0.0
        %1070 = vmatprep.subr.mxu0 0.0
        %1071 = vmatpush1.msra.mxu0 0.0
        %1072 = vmatprep.subr.mxu0 0.0
        %1073 = vmatpush1.msra.mxu0 0.0
        %1074 = vmatprep.subr.mxu0 0.0
        %1075 = vmatpush1.msra.mxu0 0.0
        %1076 = vmatprep.subr.mxu0 0.0
        %1077 = vmatpush1.msra.mxu0 0.0
        %1078 = vmatprep.subr.mxu0 0.0
        %1079 = vmatpush1.msra.mxu0 0.0
        %1080 = vmatprep.subr.mxu0 0.0
        %1081 = vmatpush1.msra.mxu0 0.0
        %1082 = vmatprep.subr.mxu0 0.0
        %1083 = vmatpush1.msra.mxu0 0.0
        %1084 = vmatprep.subr.mxu0 0.0
        %1085 = vmatpush1.msra.mxu0 0.0
        %1086 = vmatprep.subr.mxu0 0.0
        %1087 = vmatpush1.msra.mxu0 0.0
        %1088 = vmatprep.subr.mxu0 0.0
        %1089 = vmatpush1.msra.mxu0 0.0
        %1090 = vmatprep.subr.mxu0 0.0
        %1091 = vmatpush1.msra.mxu0 0.0
        %1092 = vmatprep.subr.mxu0 0.0
        %1093 = vmatpush1.msra.mxu0 0.0
        %1094 = vmatprep.subr.mxu0 0.0
        %1095 = vmatpush1.msra.mxu0 0.0
        %1096 = vmatprep.subr.mxu0 0.0
        %1097 = vmatpush1.msra.mxu0 0.0
        %1098 = vmatprep.subr.mxu0 0.0
        %1099 = vmatpush1.msra.mxu0 0.0
        %1100 = vmatprep.subr.mxu0 0.0
        %1101 = vmatpush1.msra.mxu0 0.0
        %1102 = vmatprep.subr.mxu0 0.0
        %1103 = vmatpush1.msra.mxu0 0.0
        %1104 = vmatprep.subr.mxu0 0.0
        %1105 = vmatpush1.msra.mxu0 0.0
        %1106 = vmatprep.subr.mxu0 0.0
        %1107 = vmatpush1.msra.mxu0 0.0
        %1108 = vmatprep.subr.mxu0 0.0
        %1109 = vmatpush1.msra.mxu0 0.0
        %1110 = vmatprep.subr.mxu0 0.0
        %1111 = vmatpush1.msra.mxu0 0.0
        %1112 = vmatprep.subr.mxu0 0.0
        %1113 = vmatpush1.msra.mxu0 0.0
        %1114 = vmatprep.mubr.f32.mxu0 0.0
        %1115 = vmatmul.mubr.f32.gmra.mrb[0].mxu0 %v1048
        %v1116 = vpop.f32.mrb[0].mxu0
        %v1117 = vadd.f32 0.0, %v1116
        %v1118 = vpop.f32.mrb[0].mxu0
        %1119 = vdwg.mxu0
        %v1120 = vld [vmem:[%s5] sm:$0xff]
        %s1121 = scalar_lea.vmem %s5, 8
        %v1122 = vld [vmem:[%s1121] sm:$0xff]
        %v1124 = vsel %vm466, %v971, 0
        %1126 = vmatprep.subr.mxu0 0.0
        %1127 = vmatpush1.msra.mxu0 %v1122
        %1128 = vmatprep.subr.mxu0 0.0
        %1129 = vmatpush1.msra.mxu0 0.0
        %1130 = vmatprep.subr.mxu0 0.0
        %1131 = vmatpush1.msra.mxu0 0.0
        %1132 = vmatprep.subr.mxu0 0.0
        %1133 = vmatpush1.msra.mxu0 0.0
        %1134 = vmatprep.subr.mxu0 0.0
        %1135 = vmatpush1.msra.mxu0 0.0
        %1136 = vmatprep.subr.mxu0 0.0
        %1137 = vmatpush1.msra.mxu0 0.0
        %1138 = vmatprep.subr.mxu0 0.0
        %1139 = vmatpush1.msra.mxu0 0.0
        %1140 = vmatprep.subr.mxu0 0.0
        %1141 = vmatpush1.msra.mxu0 0.0
        %1142 = vmatprep.subr.mxu0 0.0
        %1143 = vmatpush1.msra.mxu0 0.0
        %1144 = vmatprep.subr.mxu0 0.0
        %1145 = vmatpush1.msra.mxu0 0.0
        %1146 = vmatprep.subr.mxu0 0.0
        %1147 = vmatpush1.msra.mxu0 0.0
        %1148 = vmatprep.subr.mxu0 0.0
        %1149 = vmatpush1.msra.mxu0 0.0
        %1150 = vmatprep.subr.mxu0 0.0
        %1151 = vmatpush1.msra.mxu0 0.0
        %1152 = vmatprep.subr.mxu0 0.0
        %1153 = vmatpush1.msra.mxu0 0.0
        %1154 = vmatprep.subr.mxu0 0.0
        %1155 = vmatpush1.msra.mxu0 0.0
        %1156 = vmatprep.subr.mxu0 0.0
        %1157 = vmatpush1.msra.mxu0 0.0
        %1158 = vmatprep.subr.mxu0 0.0
        %1159 = vmatpush1.msra.mxu0 0.0
        %1160 = vmatprep.subr.mxu0 0.0
        %1161 = vmatpush1.msra.mxu0 0.0
        %1162 = vmatprep.subr.mxu0 0.0
        %1163 = vmatpush1.msra.mxu0 0.0
        %1164 = vmatprep.subr.mxu0 0.0
        %1165 = vmatpush1.msra.mxu0 0.0
        %1166 = vmatprep.subr.mxu0 0.0
        %1167 = vmatpush1.msra.mxu0 0.0
        %1168 = vmatprep.subr.mxu0 0.0
        %1169 = vmatpush1.msra.mxu0 0.0
        %1170 = vmatprep.subr.mxu0 0.0
        %1171 = vmatpush1.msra.mxu0 0.0
        %1172 = vmatprep.subr.mxu0 0.0
        %1173 = vmatpush1.msra.mxu0 0.0
        %1174 = vmatprep.subr.mxu0 0.0
        %1175 = vmatpush1.msra.mxu0 0.0
        %1176 = vmatprep.subr.mxu0 0.0
        %1177 = vmatpush1.msra.mxu0 0.0
        %1178 = vmatprep.subr.mxu0 0.0
        %1179 = vmatpush1.msra.mxu0 0.0
        %1180 = vmatprep.subr.mxu0 0.0
        %1181 = vmatpush1.msra.mxu0 0.0
        %1182 = vmatprep.subr.mxu0 0.0
        %1183 = vmatpush1.msra.mxu0 0.0
        %1184 = vmatprep.subr.mxu0 0.0
        %1185 = vmatpush1.msra.mxu0 0.0
        %1186 = vmatprep.subr.mxu0 0.0
        %1187 = vmatpush1.msra.mxu0 0.0
        %1188 = vmatprep.subr.mxu0 0.0
        %1189 = vmatpush1.msra.mxu0 0.0
        %1190 = vmatprep.mubr.f32.mxu0 0.0
        %1191 = vmatmul.mubr.f32.gmra.mrb[0].mxu0 %v1124
        %v1192 = vpop.f32.mrb[0].mxu0
        %v1193 = vadd.f32 0.0, %v1192
        %v1194 = vpop.f32.mrb[0].mxu0
        %1195 = vdwg.mxu0
        %v1197 = vsel %vm466, %v898, 0
        %1199 = vmatprep.subr.mxu0 0.0
        %1200 = vmatpush1.msra.mxu0 %v1120
        %1201 = vmatprep.subr.mxu0 0.0
        %1202 = vmatpush1.msra.mxu0 0.0
        %1203 = vmatprep.subr.mxu0 0.0
        %1204 = vmatpush1.msra.mxu0 0.0
        %1205 = vmatprep.subr.mxu0 0.0
        %1206 = vmatpush1.msra.mxu0 0.0
        %1207 = vmatprep.subr.mxu0 0.0
        %1208 = vmatpush1.msra.mxu0 0.0
        %1209 = vmatprep.subr.mxu0 0.0
        %1210 = vmatpush1.msra.mxu0 0.0
        %1211 = vmatprep.subr.mxu0 0.0
        %1212 = vmatpush1.msra.mxu0 0.0
        %1213 = vmatprep.subr.mxu0 0.0
        %1214 = vmatpush1.msra.mxu0 0.0
        %1215 = vmatprep.subr.mxu0 0.0
        %1216 = vmatpush1.msra.mxu0 0.0
        %1217 = vmatprep.subr.mxu0 0.0
        %1218 = vmatpush1.msra.mxu0 0.0
        %1219 = vmatprep.subr.mxu0 0.0
        %1220 = vmatpush1.msra.mxu0 0.0
        %1221 = vmatprep.subr.mxu0 0.0
        %1222 = vmatpush1.msra.mxu0 0.0
        %1223 = vmatprep.subr.mxu0 0.0
        %1224 = vmatpush1.msra.mxu0 0.0
        %1225 = vmatprep.subr.mxu0 0.0
        %1226 = vmatpush1.msra.mxu0 0.0
        %1227 = vmatprep.subr.mxu0 0.0
        %1228 = vmatpush1.msra.mxu0 0.0
        %1229 = vmatprep.subr.mxu0 0.0
        %1230 = vmatpush1.msra.mxu0 0.0
        %1231 = vmatprep.subr.mxu0 0.0
        %1232 = vmatpush1.msra.mxu0 0.0
        %1233 = vmatprep.subr.mxu0 0.0
        %1234 = vmatpush1.msra.mxu0 0.0
        %1235 = vmatprep.subr.mxu0 0.0
        %1236 = vmatpush1.msra.mxu0 0.0
        %1237 = vmatprep.subr.mxu0 0.0
        %1238 = vmatpush1.msra.mxu0 0.0
        %1239 = vmatprep.subr.mxu0 0.0
        %1240 = vmatpush1.msra.mxu0 0.0
        %1241 = vmatprep.subr.mxu0 0.0
        %1242 = vmatpush1.msra.mxu0 0.0
        %1243 = vmatprep.subr.mxu0 0.0
        %1244 = vmatpush1.msra.mxu0 0.0
        %1245 = vmatprep.subr.mxu0 0.0
        %1246 = vmatpush1.msra.mxu0 0.0
        %1247 = vmatprep.subr.mxu0 0.0
        %1248 = vmatpush1.msra.mxu0 0.0
        %1249 = vmatprep.subr.mxu0 0.0
        %1250 = vmatpush1.msra.mxu0 0.0
        %1251 = vmatprep.subr.mxu0 0.0
        %1252 = vmatpush1.msra.mxu0 0.0
        %1253 = vmatprep.subr.mxu0 0.0
        %1254 = vmatpush1.msra.mxu0 0.0
        %1255 = vmatprep.subr.mxu0 0.0
        %1256 = vmatpush1.msra.mxu0 0.0
        %1257 = vmatprep.subr.mxu0 0.0
        %1258 = vmatpush1.msra.mxu0 0.0
        %1259 = vmatprep.subr.mxu0 0.0
        %1260 = vmatpush1.msra.mxu0 0.0
        %1261 = vmatprep.subr.mxu0 0.0
        %1262 = vmatpush1.msra.mxu0 0.0
        %1263 = vmatprep.mubr.f32.mxu0 0.0
        %1264 = vmatmul.mubr.f32.gmra.mrb[0].mxu0 %v1197
        %v1265 = vpop.f32.mrb[0].mxu0
        %v1266 = vadd.f32 %v1193, %v1265
        %v1267 = vpop.f32.mrb[0].mxu0
        %1268 = vdwg.mxu0
        %s1269 = scalar_lea.vmem %s5, 16
        %v1270 = vld [vmem:[%s1269] sm:$0xff]
        %v1272 = vsel %vm466, %v1044, 0
        %1274 = vmatprep.subr.mxu0 0.0
        %1275 = vmatpush1.msra.mxu0 %v1270
        %1276 = vmatprep.subr.mxu0 0.0
        %1277 = vmatpush1.msra.mxu0 0.0
        %1278 = vmatprep.subr.mxu0 0.0
        %1279 = vmatpush1.msra.mxu0 0.0
        %1280 = vmatprep.subr.mxu0 0.0
        %1281 = vmatpush1.msra.mxu0 0.0
        %1282 = vmatprep.subr.mxu0 0.0
        %1283 = vmatpush1.msra.mxu0 0.0
        %1284 = vmatprep.subr.mxu0 0.0
        %1285 = vmatpush1.msra.mxu0 0.0
        %1286 = vmatprep.subr.mxu0 0.0
        %1287 = vmatpush1.msra.mxu0 0.0
        %1288 = vmatprep.subr.mxu0 0.0
        %1289 = vmatpush1.msra.mxu0 0.0
        %1290 = vmatprep.subr.mxu0 0.0
        %1291 = vmatpush1.msra.mxu0 0.0
        %1292 = vmatprep.subr.mxu0 0.0
        %1293 = vmatpush1.msra.mxu0 0.0
        %1294 = vmatprep.subr.mxu0 0.0
        %1295 = vmatpush1.msra.mxu0 0.0
        %1296 = vmatprep.subr.mxu0 0.0
        %1297 = vmatpush1.msra.mxu0 0.0
        %1298 = vmatprep.subr.mxu0 0.0
        %1299 = vmatpush1.msra.mxu0 0.0
        %1300 = vmatprep.subr.mxu0 0.0
        %1301 = vmatpush1.msra.mxu0 0.0
        %1302 = vmatprep.subr.mxu0 0.0
        %1303 = vmatpush1.msra.mxu0 0.0
        %1304 = vmatprep.subr.mxu0 0.0
        %1305 = vmatpush1.msra.mxu0 0.0
        %1306 = vmatprep.subr.mxu0 0.0
        %1307 = vmatpush1.msra.mxu0 0.0
        %1308 = vmatprep.subr.mxu0 0.0
        %1309 = vmatpush1.msra.mxu0 0.0
        %1310 = vmatprep.subr.mxu0 0.0
        %1311 = vmatpush1.msra.mxu0 0.0
        %1312 = vmatprep.subr.mxu0 0.0
        %1313 = vmatpush1.msra.mxu0 0.0
        %1314 = vmatprep.subr.mxu0 0.0
        %1315 = vmatpush1.msra.mxu0 0.0
        %1316 = vmatprep.subr.mxu0 0.0
        %1317 = vmatpush1.msra.mxu0 0.0
        %1318 = vmatprep.subr.mxu0 0.0
        %1319 = vmatpush1.msra.mxu0 0.0
        %1320 = vmatprep.subr.mxu0 0.0
        %1321 = vmatpush1.msra.mxu0 0.0
        %1322 = vmatprep.subr.mxu0 0.0
        %1323 = vmatpush1.msra.mxu0 0.0
        %1324 = vmatprep.subr.mxu0 0.0
        %1325 = vmatpush1.msra.mxu0 0.0
        %1326 = vmatprep.subr.mxu0 0.0
        %1327 = vmatpush1.msra.mxu0 0.0
        %1328 = vmatprep.subr.mxu0 0.0
        %1329 = vmatpush1.msra.mxu0 0.0
        %1330 = vmatprep.subr.mxu0 0.0
        %1331 = vmatpush1.msra.mxu0 0.0
        %1332 = vmatprep.subr.mxu0 0.0
        %1333 = vmatpush1.msra.mxu0 0.0
        %1334 = vmatprep.subr.mxu0 0.0
        %1335 = vmatpush1.msra.mxu0 0.0
        %1336 = vmatprep.subr.mxu0 0.0
        %1337 = vmatpush1.msra.mxu0 0.0
        %1338 = vmatprep.mubr.f32.mxu0 0.0
        %1339 = vmatmul.mubr.f32.gmra.mrb[0].mxu0 %v1272
        %v1340 = vpop.f32.mrb[0].mxu0
        %v1341 = vadd.f32 0.0, %v1340
        %v1342 = vpop.f32.mrb[0].mxu0
        %1343 = vdwg.mxu0
        %v1344 = vadd.f32 %v1266, %v1341
        %s1345 = scalar_lea.vmem %s5, 24
        %v1346 = vld [vmem:[%s1345] sm:$0xff]
        %v1348 = vsel %vm466, %v1117, 0
        %1350 = vmatprep.subr.mxu0 0.0
        %1351 = vmatpush1.msra.mxu0 %v1346
        %1352 = vmatprep.subr.mxu0 0.0
        %1353 = vmatpush1.msra.mxu0 0.0
        %1354 = vmatprep.subr.mxu0 0.0
        %1355 = vmatpush1.msra.mxu0 0.0
        %1356 = vmatprep.subr.mxu0 0.0
        %1357 = vmatpush1.msra.mxu0 0.0
        %1358 = vmatprep.subr.mxu0 0.0
        %1359 = vmatpush1.msra.mxu0 0.0
        %1360 = vmatprep.subr.mxu0 0.0
        %1361 = vmatpush1.msra.mxu0 0.0
        %1362 = vmatprep.subr.mxu0 0.0
        %1363 = vmatpush1.msra.mxu0 0.0
        %1364 = vmatprep.subr.mxu0 0.0
        %1365 = vmatpush1.msra.mxu0 0.0
        %1366 = vmatprep.subr.mxu0 0.0
        %1367 = vmatpush1.msra.mxu0 0.0
        %1368 = vmatprep.subr.mxu0 0.0
        %1369 = vmatpush1.msra.mxu0 0.0
        %1370 = vmatprep.subr.mxu0 0.0
        %1371 = vmatpush1.msra.mxu0 0.0
        %1372 = vmatprep.subr.mxu0 0.0
        %1373 = vmatpush1.msra.mxu0 0.0
        %1374 = vmatprep.subr.mxu0 0.0
        %1375 = vmatpush1.msra.mxu0 0.0
        %1376 = vmatprep.subr.mxu0 0.0
        %1377 = vmatpush1.msra.mxu0 0.0
        %1378 = vmatprep.subr.mxu0 0.0
        %1379 = vmatpush1.msra.mxu0 0.0
        %1380 = vmatprep.subr.mxu0 0.0
        %1381 = vmatpush1.msra.mxu0 0.0
        %1382 = vmatprep.subr.mxu0 0.0
        %1383 = vmatpush1.msra.mxu0 0.0
        %1384 = vmatprep.subr.mxu0 0.0
        %1385 = vmatpush1.msra.mxu0 0.0
        %1386 = vmatprep.subr.mxu0 0.0
        %1387 = vmatpush1.msra.mxu0 0.0
        %1388 = vmatprep.subr.mxu0 0.0
        %1389 = vmatpush1.msra.mxu0 0.0
        %1390 = vmatprep.subr.mxu0 0.0
        %1391 = vmatpush1.msra.mxu0 0.0
        %1392 = vmatprep.subr.mxu0 0.0
        %1393 = vmatpush1.msra.mxu0 0.0
        %1394 = vmatprep.subr.mxu0 0.0
        %1395 = vmatpush1.msra.mxu0 0.0
        %1396 = vmatprep.subr.mxu0 0.0
        %1397 = vmatpush1.msra.mxu0 0.0
        %1398 = vmatprep.subr.mxu0 0.0
        %1399 = vmatpush1.msra.mxu0 0.0
        %1400 = vmatprep.subr.mxu0 0.0
        %1401 = vmatpush1.msra.mxu0 0.0
        %1402 = vmatprep.subr.mxu0 0.0
        %1403 = vmatpush1.msra.mxu0 0.0
        %1404 = vmatprep.subr.mxu0 0.0
        %1405 = vmatpush1.msra.mxu0 0.0
        %1406 = vmatprep.subr.mxu0 0.0
        %1407 = vmatpush1.msra.mxu0 0.0
        %1408 = vmatprep.subr.mxu0 0.0
        %1409 = vmatpush1.msra.mxu0 0.0
        %1410 = vmatprep.subr.mxu0 0.0
        %1411 = vmatpush1.msra.mxu0 0.0
        %1412 = vmatprep.subr.mxu0 0.0
        %1413 = vmatpush1.msra.mxu0 0.0
        %1414 = vmatprep.mubr.f32.mxu0 0.0
        %1415 = vmatmul.mubr.f32.gmra.mrb[0].mxu0 %v1348
        %v1416 = vpop.f32.mrb[0].mxu0
        %v1417 = vadd.f32 0.0, %v1416
        %v1418 = vpop.f32.mrb[0].mxu0
        %1419 = vdwg.mxu0
        %v1420 = vadd.f32 %v1344, %v1417
        %v1421 = vld [vmem:[%s6] sm:$0x1]
        %v1423 = vlaneseq
        %v1424 = vshrl.u32 %v1423, 7
        %v1425 = vsub.s32 0, %v1424
        %v1426 = vrot.slane %v1421, %v1425
        %v1428 = vadd.f32 %v1420, %v1426
        %v1429 = vadd.f32 %v1428, %v438
        %vm1430 = vcmask 261120
        %v1431 = vsel %vm1430, %v1429, 0.0
        %1432 = vadd.xlane.f32.xlu0 %v1431
        %v1433 = vpop.xlane.xlu0 %1432
        %v1434 = vrcp.pop 32.0
        %v1435 = vmul.f32 %v1433, %v1434
        %v1436 = vsub.f32 %v1429, %v1435
        %v1437 = vmul.f32 %v1436, %v1436
        %v1438 = vsel %vm1430, %v1437, 0.0
        %1439 = vadd.xlane.f32.xlu0 %v1438
        %v1440 = vpop.xlane.xlu0 %1439
        %v1441 = vmul.f32 %v1440, %v1434
        %v1442 = vadd.f32 %v1441, 1e-12
        %v1443 = vrsqrt.pop %v1442
        %v1444 = vmul.f32 %v1436, %v1443
        %v1445 = vld [vmem:[%s7] sm:$0x1]
        %v1447 = vlaneseq
        %v1448 = vshrl.u32 %v1447, 7
        %v1449 = vsub.s32 0, %v1448
        %v1450 = vrot.slane %v1445, %v1449
        %v1452 = vmul.f32 %v1444, %v1450
        %v1453 = vld [vmem:[%s8] sm:$0x1]
        %v1455 = vlaneseq
        %v1456 = vshrl.u32 %v1455, 7
        %v1457 = vsub.s32 0, %v1456
        %v1458 = vrot.slane %v1453, %v1457
        %v1460 = vadd.f32 %v1452, %v1458
        %1461 = vst.msk [vmem:[%s409] sm:$0xff] %vm1430, %v1460
        %s1462 = sand.u32 %s263, 1
        %s1463 = scalar_lea.sflag [#allocation3], %s1462
        %s1464 = sand.u32 %s263, 1
        %s1465 = smul.addr %s1464, 8
        %s1466 = scalar_lea.vmem [#allocation2], %s1465
        // Predicated region
        $region57: #{tpu_custom_call.1} parent=55 // pred_check
          %p1467 = pneg %p273
        $region58: #{tpu_custom_call.1} parent=55 // pred_check_branch
          %1469 = sbr.rel (%p1467) target = $region60
        $region59: #{tpu_custom_call.1} parent=55 // pred_region
          %s1471 = ssub.s32 128, 128
          %1472 = vsyncadd %s1463, %s1471
          %s1473 = sadd.s32 %s28, %s27
          %s1474 = smul.addr %s1473, 128
          %s1475 = scalar_lea.hbm %s9, %s1474
          %s1477 = sshll.u32 %s1466, 4
          %s1478 = int_to_ptr.vmem [resolvable:$true] %s1477
          %1480 = dma.vmem_to_hbm [thread:$0]  %s1478, 128, %s1475, %s1463
        $region60: #{tpu_custom_call.1} parent=55 // pred_fallthru
          _
      $region56: #{tpu_custom_call.1} parent=5 // pred_fallthru
        _
      %p1481 = scmp.le.s32.totalorder 2, %s18
      // Predicated region
      $region61: #{tpu_custom_call.1} parent=5 // pred_check
        %p1482 = pneg %p1481
      $region62: #{tpu_custom_call.1} parent=5 // pred_check_branch
        %1484 = sbr.rel (%p1482) target = $region64
      $region63: #{tpu_custom_call.1} parent=5 // pred_region
        %s1485 = ssub.s32 %s18, 2
        // Predicated region
        $region65: #{tpu_custom_call.1} parent=63 // pred_check
          %p1486 = pneg %p279
        $region66: #{tpu_custom_call.1} parent=63 // pred_check_branch
          %1488 = sbr.rel (%p1486) target = $region68
        $region67: #{tpu_custom_call.1} parent=63 // pred_region
          %s1489 = sand.u32 %s264, 1
          %s1490 = scalar_lea.sflag [#allocation3], %s1489
          %s1491 = sand.u32 %s264, 1
          %s1492 = smul.addr %s1491, 8
          %s1493 = scalar_lea.vmem [#allocation2], %s1492
          %1494 = dma.done %s1490, 128
        $region68: #{tpu_custom_call.1} parent=63 // pred_fallthru
          _
      $region64: #{tpu_custom_call.1} parent=5 // pred_fallthru
        _
    $region6: #{tpu_custom_call.1} parent=1 // loop_footer
      %s22 = sadd.s32 1, %s18
    $region7: #{tpu_custom_call.1} parent=1 // loop_footer_branch
      %17 = sbr.rel target = $region3
    $region8: #{tpu_custom_call.1} parent=1 // loop_exit
      _
    %1495 = vsyncpa [#allocation3], 1
    %s1496 = scalar_lea.sflag [#allocation3], 1
    %1497 = vsyncpa %s1496, 1

</llo_original>
